<compile_context>
chip_gen: v7x
topology: tpu7x:2x2x1
jax: 0.10.0
libtpu: 0.0.40
codegen_flags: <defaults>
</compile_context>

<pallas_src>
import math

import jax
import jax.numpy as jnp
from jax import lax
from jax.experimental import pallas as pl
from jax.experimental.pallas import tpu as pltpu

# ----------------------------- configuration --------------------------------
BATCH = 2
SEQ = 16                        # L
DIM = 32                        # d_model
D_STATE = 8
D_CONV = 3
EXPAND = 1
D_INNER = EXPAND * DIM          # 32
D_HALF = D_INNER // 2           # 16
DT_RANK = math.ceil(DIM / 16)   # 2
MLP_HIDDEN = int(DIM * 4.0)     # 128
FLAT = D_HALF * D_STATE         # 128 = flat state width (lane = d*d_state + n)
LANES = 128
LN_EPS = 1e-5
DT_MIN, DT_MAX, DT_FLOOR = 1e-3, 1e-1, 1e-4

assert SEQ & (SEQ - 1) == 0, "in-kernel scan masks use a power-of-two SEQ"


def _a8(n):                     # align row offset to a sublane (8-row) boundary
    return (n + 7) // 8 * 8


# ---- single merged parameter array (P_ROWS, 128); narrow weights live in the
# ---- leading lanes of 128-lane rows; every block starts 8-row aligned. ------
OFF_IN = 0                              # (DIM, D_INNER)     in_proj  [x | z]
OFF_CONV = _a8(OFF_IN + DIM)            # (D_CONV, D_INNER)  fused depthwise conv
OFF_DT = _a8(OFF_CONV + D_CONV)         # (D_INNER, D_INNER) dt weight, zero padded
OFF_DTB = _a8(OFF_DT + D_INNER)         # (1, D_INNER)       2*dt_bias (z lanes 0)
OFF_RD = _a8(OFF_DTB + 1)               # (D_INNER, FLAT)    d->flat select, z rows 0
OFF_B = _a8(OFF_RD + D_INNER)           # (D_INNER, FLAT)    x_proj_B @ Rn, z rows 0
OFF_C = _a8(OFF_B + D_INNER)            # (D_INNER, FLAT)    x_proj_C @ Rn, z rows 0
OFF_A = _a8(OFF_C + D_INNER)            # (1, FLAT)          -exp(A_log) flattened
OFF_SZ = _a8(OFF_A + 1)                 # (D_INNER, DIM)     [diag(D)@w_out_y ; w_out_z]
OFF_YB = _a8(OFF_SZ + D_INNER)          # (FLAT, DIM)        Rd.T @ w_out_y
OFF_LN = _a8(OFF_YB + FLAT)             # (4, DIM)           ln1_w, ln1_b, ln2_w, ln2_b
OFF_FC1 = _a8(OFF_LN + 4)               # (DIM, MLP_HIDDEN)
OFF_BFC1 = _a8(OFF_FC1 + DIM)           # (1, MLP_HIDDEN)
OFF_FC2 = _a8(OFF_BFC1 + 1)             # (MLP_HIDDEN, DIM)
OFF_BFC2 = _a8(OFF_FC2 + MLP_HIDDEN)    # (1, DIM)
P_ROWS = _a8(OFF_BFC2 + 1)              # 528


# ------------------------- shared math helpers -------------------------------
def _layernorm(v, w, b):
    mu = jnp.mean(v, axis=-1, keepdims=True)
    var = jnp.mean((v - mu) ** 2, axis=-1, keepdims=True)
    return (v - mu) * lax.rsqrt(var + LN_EPS) * w + b


def _silu(v):
    return v * jax.nn.sigmoid(v)


def _softplus(v):
    safe = jnp.minimum(v, 20.0)
    return jnp.where(v > 20.0, v, jnp.log(1.0 + jnp.exp(safe)))


def _gelu_tanh(v):
    # TODO(synk): PyTorch nn.GELU() is the exact erf form; tanh approximation
    # (max abs deviation ~3e-4) is used since erf lowering is not guaranteed.
    c = 0.7978845608028654  # sqrt(2/pi)
    return 0.5 * v * (1.0 + jnp.tanh(c * (v + 0.044715 * v * v * v)))


def _row_roll(v, s):
    # Equivalent to jnp.roll(v, s, axis=0): out[r] = v[(r - s) % n].
    # (Sublane rotate; wrapped rows are always masked away by the caller.)
    n = v.shape[0]
    s = s % n
    return jnp.concatenate([v[n - s:, :], v[:n - s, :]], axis=0)


# ------------------------------- the kernel ----------------------------------
def block_kernel(x_ref, p_ref, out_ref):
    x = x_ref[...]                                   # (BL, DIM), rows r = b*SEQ + t
    bl = x.shape[0]

    pos = lax.broadcasted_iota(jnp.int32, (bl, 1), 0)
    pos_t = jnp.bitwise_and(pos, SEQ - 1)            # position within each sequence

    # ---- norm1 + fused in_proj ([x | z] halves in one 32x32x32 matmul) ------
    ln1_w = p_ref[OFF_LN + 0:OFF_LN + 1, :DIM]
    ln1_b = p_ref[OFF_LN + 1:OFF_LN + 2, :DIM]
    h = _layernorm(x, ln1_w, ln1_b)
    w_in = p_ref[OFF_IN:OFF_IN + DIM, :D_INNER]
    xz = jnp.dot(h, w_in, preferred_element_type=jnp.float32)        # (BL, 32)

    # ---- fused depthwise conv1d (k=3, 'same') + SiLU on both halves ---------
    # Sequence neighbour is +-1 row; masks reproduce zero padding at sequence
    # edges so the shift never leaks across batch boundaries.
    w_conv = p_ref[OFF_CONV:OFF_CONV + D_CONV, :D_INNER]             # (3, 32)
    m_prev = (pos_t >= 1).astype(jnp.float32)
    m_next = (pos_t < SEQ - 1).astype(jnp.float32)
    prev = _row_roll(xz, 1) * m_prev
    nxt = _row_roll(xz, -1) * m_next
    xzc = _silu(prev * w_conv[0:1, :] + xz * w_conv[1:2, :] + nxt * w_conv[2:3, :])

    # ---- SSM parameterization (fused matmuls, fully vectorized) -------------
    # NOTE: the reference module adds dt_proj.bias twice (inside the Linear AND
    # as delta_bias inside selective_scan) -- the packed bias is 2*b_dt.
    w_dt = p_ref[OFF_DT:OFF_DT + D_INNER, :D_INNER]                  # z rows/cols = 0
    dt_b2 = p_ref[OFF_DTB:OFF_DTB + 1, :D_INNER]
    delta = _softplus(jnp.dot(xzc, w_dt, preferred_element_type=jnp.float32) + dt_b2)
    # Stacked [delta ; delta*u] against the d->flat selection (z rows are zero,
    # so the junk z lanes of delta never reach the scan).
    rd32 = p_ref[OFF_RD:OFF_RD + D_INNER, :]                         # (32, 128)
    rep = jnp.dot(jnp.concatenate([delta, delta * xzc], axis=0), rd32,
                  preferred_element_type=jnp.float32)                # (2*BL, 128)
    delta_rep = rep[:bl, :]
    du_rep = rep[bl:, :]
    # B and C in one matmul with a lane-concatenated (32, 256) RHS.
    w_bc = jnp.concatenate([p_ref[OFF_B:OFF_B + D_INNER, :],
                            p_ref[OFF_C:OFF_C + D_INNER, :]], axis=1)
    bc = jnp.dot(xzc, w_bc, preferred_element_type=jnp.float32)      # (BL, 256)
    b_rep = bc[:, :FLAT]
    c_rep = bc[:, FLAT:]
    a_flat = p_ref[OFF_A:OFF_A + 1, :]
    da = jnp.exp(delta_rep * a_flat)                  # exp(delta*A)   (BL, 128)
    dbu = du_rep * b_rep                              # delta*u*B      (BL, 128)

    # ---- selective scan: Hillis-Steele, log2(SEQ) full-width VPU steps ------
    # Pair (A, B) represents the affine map h -> A*h + B;
    # combine(prefix, cur) = (A_cur*A_prefix, A_cur*B_prefix + B_cur).
    acc_a = da
    acc_b = dbu
    off = 1
    while off < SEQ:
        valid = (pos_t >= off).astype(jnp.float32)    # predecessor in same sequence
        a_prev = _row_roll(acc_a, off) * valid + (1.0 - valid)
        b_prev = _row_roll(acc_b, off) * valid
        acc_b = acc_a * b_prev + acc_b                # uses old acc_a
        acc_a = acc_a * a_prev
        off *= 2
    y_flat = acc_b * c_rep                            # h * C          (BL, 128)

    # ---- out_proj: sum over n, D-skip and z half folded into 2 matmuls ------
    w_yb = p_ref[OFF_YB:OFF_YB + FLAT, :DIM]
    w_sz = p_ref[OFF_SZ:OFF_SZ + D_INNER, :DIM]
    mix = (jnp.dot(y_flat, w_yb, preferred_element_type=jnp.float32)
           + jnp.dot(xzc, w_sz, preferred_element_type=jnp.float32))
    x1 = x + mix                                      # residual 1 (gamma_1 = 1)

    # ---- norm2 + Mlp + residual 2 --------------------------------------------
    ln2_w = p_ref[OFF_LN + 2:OFF_LN + 3, :DIM]
    ln2_b = p_ref[OFF_LN + 3:OFF_LN + 4, :DIM]
    h2 = _layernorm(x1, ln2_w, ln2_b)
    w_fc1 = p_ref[OFF_FC1:OFF_FC1 + DIM, :]
    b_fc1 = p_ref[OFF_BFC1:OFF_BFC1 + 1, :]
    m = _gelu_tanh(jnp.dot(h2, w_fc1, preferred_element_type=jnp.float32) + b_fc1)
    w_fc2 = p_ref[OFF_FC2:OFF_FC2 + MLP_HIDDEN, :DIM]
    b_fc2 = p_ref[OFF_BFC2:OFF_BFC2 + 1, :DIM]
    out_ref[...] = x1 + jnp.dot(m, w_fc2, preferred_element_type=jnp.float32) + b_fc2


# ------------------------------ wrapper --------------------------------------
@jax.jit
def block_forward(x, packed):
    b, l, d = x.shape
    bl = b * l
    x2 = x.reshape(bl, d)        # natural (b-major) row layout: free bitcast
    out = pl.pallas_call(
        block_kernel,
        out_shape=jax.ShapeDtypeStruct((bl, d), jnp.float32),
        grid=(1,),
        in_specs=[
            pl.BlockSpec((bl, d), lambda i: (0, 0)),
            pl.BlockSpec(packed.shape, lambda i: (0, 0)),
        ],
        out_specs=pl.BlockSpec((bl, d), lambda i: (0, 0)),
        # Single-invocation kernel: the serial scan would not shrink if split
        # across cores; on v7x, put independent Blocks/images on a leading
        # "parallel" grid axis instead.
        compiler_params=pltpu.CompilerParams(dimension_semantics=("arbitrary",)),
        cost_estimate=pl.CostEstimate(flops=2_200_000, transcendentals=20_000,
                                      bytes_accessed=290_000),
    )(x2, packed)
    return out.reshape(b, l, d)


# ------------------ parameter packing (done once, outside jit) ---------------
def pack_params(p):
    f32 = jnp.float32
    lane = jnp.arange(FLAT)
    # selection matrices for the flat state layout: lane l = d*d_state + n
    rd = (lane[None, :] // D_STATE == jnp.arange(D_HALF)[:, None]).astype(f32)
    rn = (lane[None, :] % D_STATE == jnp.arange(D_STATE)[:, None]).astype(f32)
    zeros_h = jnp.zeros((D_HALF, FLAT), f32)

    w_dt_full = p["w_xproj_t"][:, :DT_RANK] @ p["w_dt_t"]             # (16, 16)
    w_dt32 = jnp.zeros((D_INNER, D_INNER), f32).at[:D_HALF, :D_HALF].set(w_dt_full)
    dt_b32 = jnp.zeros((1, D_INNER), f32).at[:, :D_HALF].set(2.0 * p["b_dt"])
    rd32 = jnp.concatenate([rd, zeros_h], axis=0)
    w_b32 = jnp.concatenate(
        [p["w_xproj_t"][:, DT_RANK:DT_RANK + D_STATE] @ rn, zeros_h], axis=0)
    w_c32 = jnp.concatenate(
        [p["w_xproj_t"][:, DT_RANK + D_STATE:] @ rn, zeros_h], axis=0)
    a_flat = (-jnp.exp(p["a_log"])).reshape(1, FLAT)
    w_out_y = p["w_out_t"][:D_HALF, :]
    w_out_z = p["w_out_t"][D_HALF:, :]
    w_sz = jnp.concatenate([p["d_skip"][0][:, None] * w_out_y, w_out_z], axis=0)
    w_yb = rd.T @ w_out_y                                             # (128, 32)
    w_conv = jnp.concatenate([p["w_conv_x"], p["w_conv_z"]], axis=1)  # (3, 32)
    ln_rows = jnp.concatenate([p["ln1_w"], p["ln1_b"], p["ln2_w"], p["ln2_b"]], 0)

    blocks = [
        (OFF_IN, p["w_in_t"]), (OFF_CONV, w_conv), (OFF_DT, w_dt32),
        (OFF_DTB, dt_b32), (OFF_RD, rd32), (OFF_B, w_b32), (OFF_C, w_c32),
        (OFF_A, a_flat), (OFF_SZ, w_sz), (OFF_YB, w_yb), (OFF_LN, ln_rows),
        (OFF_FC1, p["w_fc1_t"]), (OFF_BFC1, p["b_fc1"]),
        (OFF_FC2, p["w_fc2_t"]), (OFF_BFC2, p["b_fc2"]),
    ]
    packed = jnp.zeros((P_ROWS, LANES), f32)
    for off, blk in blocks:
        blk = jnp.asarray(blk, f32)
        packed = packed.at[off:off + blk.shape[0], :blk.shape[1]].set(blk)
    assert packed.shape == (P_ROWS, LANES)
    return packed


# ------------------------ pure-JAX reference ---------------------------------
def _mm(a, b):
    return jnp.matmul(a, b, precision=lax.Precision.HIGHEST)


def block_reference(x, p):
    h = _layernorm(x, p["ln1_w"], p["ln1_b"])
    xz = _mm(h, p["w_in_t"])
    xm, zm = xz[..., :D_HALF], xz[..., D_HALF:]

    def dwconv_same(v, w):
        pad = (D_CONV - 1) // 2
        vp = jnp.pad(v, ((0, 0), (pad, pad), (0, 0)))
        acc = jnp.zeros_like(v)
        for k in range(D_CONV):
            acc = acc + vp[:, k:k + v.shape[1], :] * w[k]
        return acc

    xc = _silu(dwconv_same(xm, p["w_conv_x"]))
    zc = _silu(dwconv_same(zm, p["w_conv_z"]))

    x_dbl = _mm(xc, p["w_xproj_t"])
    dt_low = x_dbl[..., :DT_RANK]
    b_mat = x_dbl[..., DT_RANK:DT_RANK + D_STATE]
    c_mat = x_dbl[..., DT_RANK + D_STATE:]
    dt = _mm(dt_low, p["w_dt_t"]) + p["b_dt"]
    delta = _softplus(dt + p["b_dt"])                 # double bias, faithful
    a = -jnp.exp(p["a_log"])                          # (d_half, N)

    def step(state, inp):
        d_t, u_t, b_t, c_t = inp                      # (B,dh),(B,dh),(B,N),(B,N)
        da = jnp.exp(d_t[:, :, None] * a[None, :, :])
        dbu = (d_t * u_t)[:, :, None] * b_t[:, None, :]
        state = da * state + dbu
        return state, jnp.sum(state * c_t[:, None, :], axis=-1)

    state0 = jnp.zeros((x.shape[0], D_HALF, D_STATE), jnp.float32)
    xs = (jnp.swapaxes(delta, 0, 1), jnp.swapaxes(xc, 0, 1),
          jnp.swapaxes(b_mat, 0, 1), jnp.swapaxes(c_mat, 0, 1))
    _, ys = lax.scan(step, state0, xs)
    y = jnp.swapaxes(ys, 0, 1) + xc * p["d_skip"]
    mix = _mm(jnp.concatenate([y, zc], axis=-1), p["w_out_t"])

    x1 = x + mix
    h2 = _layernorm(x1, p["ln2_w"], p["ln2_b"])
    m = _gelu_tanh(_mm(h2, p["w_fc1_t"]) + p["b_fc1"])
    m = _mm(m, p["w_fc2_t"]) + p["b_fc2"]
    return x1 + m


# --------------------------- deterministic init -------------------------------
def init_params(key):
    ks = jax.random.split(key, 10)
    p = {}
    p["ln1_w"] = jnp.ones((1, DIM), jnp.float32)
    p["ln1_b"] = jnp.zeros((1, DIM), jnp.float32)
    p["w_in_t"] = 0.08 * jax.random.normal(ks[0], (DIM, D_INNER), jnp.float32)
    p["w_conv_x"] = 0.30 * jax.random.normal(ks[1], (D_CONV, D_HALF), jnp.float32)
    p["w_conv_z"] = 0.30 * jax.random.normal(ks[2], (D_CONV, D_HALF), jnp.float32)
    p["w_xproj_t"] = 0.15 * jax.random.normal(
        ks[3], (D_HALF, DT_RANK + 2 * D_STATE), jnp.float32)
    dt_std = DT_RANK ** -0.5
    p["w_dt_t"] = jax.random.uniform(ks[4], (DT_RANK, D_HALF), jnp.float32,
                                     -dt_std, dt_std)
    dt = jnp.exp(jax.random.uniform(ks[5], (1, D_HALF), jnp.float32)
                 * (math.log(DT_MAX) - math.log(DT_MIN)) + math.log(DT_MIN))
    dt = jnp.maximum(dt, DT_FLOOR)
    p["b_dt"] = dt + jnp.log(-jnp.expm1(-dt))          # inverse-softplus init
    a = jnp.tile(jnp.arange(1, D_STATE + 1, dtype=jnp.float32)[None, :],
                 (D_HALF, 1))
    p["a_log"] = jnp.log(a)                            # (d_half, d_state)
    p["d_skip"] = jnp.ones((1, D_HALF), jnp.float32)
    p["w_out_t"] = 0.08 * jax.random.normal(ks[6], (D_INNER, DIM), jnp.float32)
    p["ln2_w"] = jnp.ones((1, DIM), jnp.float32)
    p["ln2_b"] = jnp.zeros((1, DIM), jnp.float32)
    p["w_fc1_t"] = 0.08 * jax.random.normal(ks[7], (DIM, MLP_HIDDEN), jnp.float32)
    p["b_fc1"] = jnp.zeros((1, MLP_HIDDEN), jnp.float32)
    p["w_fc2_t"] = 0.08 * jax.random.normal(ks[8], (MLP_HIDDEN, DIM), jnp.float32)
    p["b_fc2"] = jnp.zeros((1, DIM), jnp.float32)
    return p


# ----------------------------------- main -------------------------------------
if __name__ == "__main__":
    key = jax.random.PRNGKey(0)
    k_x, k_p = jax.random.split(key)
    x = jax.random.normal(k_x, (BATCH, SEQ, DIM), jnp.float32)
    params = init_params(k_p)
    packed = pack_params(params)

    out = block_forward(x, packed)
    out = jax.block_until_ready(out)

    ref = block_reference(x, params)
    err = float(jnp.max(jnp.abs(out - ref)))
    assert out.shape == (BATCH, SEQ, DIM)
    # Tightened 4x vs. previous version; bounds MXU f32-pass rounding while
    # catching any layout/indexing regression (those produce O(0.1-1) errors).
    assert err < 5e-3, f"kernel/reference mismatch: max abs err = {err}"
    print("KERNEL_OK")
</pallas_src>

<mosaic_0001>
module attributes {stable_mosaic.version = 11 : i64} {
  func.func @block_kernel(%arg0: i32, %arg1: memref<32x32xf32, #tpu.memory_space<vmem>>, %arg2: memref<528x128xf32, #tpu.memory_space<vmem>>, %arg3: memref<32x32xf32, #tpu.memory_space<vmem>>) attributes {dimension_semantics = [#tpu.dimension_semantics<arbitrary>], iteration_bounds = array<i64: 1>, scalar_prefetch = 0 : i64, scratch_operands = 0 : i64, tpu.core_type = #tpu.core_type<tc>, window_params = [{pipeline_mode = #tpu.pipeline_mode<synchronous>, transform_indices = @transform_0, window_bounds = array<i64: 32, 32>}, {pipeline_mode = #tpu.pipeline_mode<synchronous>, transform_indices = @transform_1, window_bounds = array<i64: 528, 128>}, {pipeline_mode = #tpu.pipeline_mode<synchronous>, transform_indices = @transform_2, window_bounds = array<i64: 32, 32>}]} {
    %c0 = arith.constant 0 : index
    %c0_0 = arith.constant 0 : index
    %0 = vector.load %arg1[%c0, %c0_0] : memref<32x32xf32, #tpu.memory_space<vmem>>, vector<32x32xf32>
    %1 = tpu.iota {dimensions = array<i32: 0>} : vector<32x1xi32>
    %c15_i32 = arith.constant 15 : i32
    %2 = vector.broadcast %c15_i32 : i32 to vector<32x1xi32>
    %3 = arith.andi %1, %2 : vector<32x1xi32>
    %c344 = arith.constant 344 : index
    %c0_1 = arith.constant 0 : index
    %4 = vector.load %arg2[%c344, %c0_1] : memref<528x128xf32, #tpu.memory_space<vmem>>, vector<1x32xf32>
    %c345 = arith.constant 345 : index
    %c0_2 = arith.constant 0 : index
    %5 = vector.load %arg2[%c345, %c0_2] : memref<528x128xf32, #tpu.memory_space<vmem>>, vector<1x32xf32>
    %cst = arith.constant dense<0.000000e+00> : vector<32xf32>
    %6 = vector.multi_reduction <add>, %0, %cst [1] : vector<32x32xf32> to vector<32xf32>
    %7 = vector.shape_cast %6 : vector<32xf32> to vector<32x1xf32>
    %cst_3 = arith.constant 3.200000e+01 : f32
    %8 = vector.broadcast %cst_3 : f32 to vector<32x1xf32>
    %9 = arith.divf %7, %8 : vector<32x1xf32>
    %10 = vector.broadcast %9 : vector<32x1xf32> to vector<32x32xf32>
    %11 = arith.subf %0, %10 : vector<32x32xf32>
    %12 = arith.mulf %11, %11 : vector<32x32xf32>
    %cst_4 = arith.constant dense<0.000000e+00> : vector<32xf32>
    %13 = vector.multi_reduction <add>, %12, %cst_4 [1] : vector<32x32xf32> to vector<32xf32>
    %14 = vector.shape_cast %13 : vector<32xf32> to vector<32x1xf32>
    %cst_5 = arith.constant 3.200000e+01 : f32
    %15 = vector.broadcast %cst_5 : f32 to vector<32x1xf32>
    %16 = arith.divf %14, %15 : vector<32x1xf32>
    %17 = vector.broadcast %9 : vector<32x1xf32> to vector<32x32xf32>
    %18 = arith.subf %0, %17 : vector<32x32xf32>
    %cst_6 = arith.constant 9.99999974E-6 : f32
    %19 = vector.broadcast %cst_6 : f32 to vector<32x1xf32>
    %20 = arith.addf %16, %19 : vector<32x1xf32>
    %21 = math.rsqrt %20 : vector<32x1xf32>
    %22 = vector.broadcast %21 : vector<32x1xf32> to vector<32x32xf32>
    %23 = arith.mulf %18, %22 : vector<32x32xf32>
    %24 = vector.broadcast %4 : vector<1x32xf32> to vector<32x32xf32>
    %25 = arith.mulf %23, %24 : vector<32x32xf32>
    %26 = vector.broadcast %5 : vector<1x32xf32> to vector<32x32xf32>
    %27 = arith.addf %25, %26 : vector<32x32xf32>
    %c0_7 = arith.constant 0 : index
    %c0_8 = arith.constant 0 : index
    %28 = vector.load %arg2[%c0_7, %c0_8] : memref<528x128xf32, #tpu.memory_space<vmem>>, vector<32x32xf32>
    %cst_9 = arith.constant dense<0.000000e+00> : vector<32x32xf32>
    %29 = tpu.matmul %27, %28, %cst_9 {dimension_numbers = #tpu.dot_dimension_numbers<[1], [0], [0], [1], [0, 0, 1, 1], [], []>} : vector<32x32xf32>, vector<32x32xf32>, vector<32x32xf32> -> vector<32x32xf32>
    %c32 = arith.constant 32 : index
    %c0_10 = arith.constant 0 : index
    %30 = vector.load %arg2[%c32, %c0_10] : memref<528x128xf32, #tpu.memory_space<vmem>>, vector<3x32xf32>
    %c1_i32 = arith.constant 1 : i32
    %31 = vector.broadcast %c1_i32 : i32 to vector<32x1xi32>
    %32 = arith.cmpi sge, %3, %31 : vector<32x1xi32>
    %33 = arith.extui %32 : vector<32x1xi1> to vector<32x1xi32>
    %34 = arith.sitofp %33 : vector<32x1xi32> to vector<32x1xf32>
    %c15_i32_11 = arith.constant 15 : i32
    %35 = vector.broadcast %c15_i32_11 : i32 to vector<32x1xi32>
    %36 = arith.cmpi slt, %3, %35 : vector<32x1xi32>
    %37 = arith.extui %36 : vector<32x1xi1> to vector<32x1xi32>
    %38 = arith.sitofp %37 : vector<32x1xi32> to vector<32x1xf32>
    %39 = vector.extract_strided_slice %29 {offsets = [31, 0], sizes = [1, 32], strides = [1, 1]} : vector<32x32xf32> to vector<1x32xf32>
    %40 = vector.extract_strided_slice %29 {offsets = [0, 0], sizes = [31, 32], strides = [1, 1]} : vector<32x32xf32> to vector<31x32xf32>
    %41 = tpu.concatenate %39, %40 in 0 : vector<1x32xf32>, vector<31x32xf32> -> vector<32x32xf32>
    %42 = vector.broadcast %34 : vector<32x1xf32> to vector<32x32xf32>
    %43 = arith.mulf %41, %42 : vector<32x32xf32>
    %44 = vector.extract_strided_slice %29 {offsets = [1, 0], sizes = [31, 32], strides = [1, 1]} : vector<32x32xf32> to vector<31x32xf32>
    %45 = vector.extract_strided_slice %29 {offsets = [0, 0], sizes = [1, 32], strides = [1, 1]} : vector<32x32xf32> to vector<1x32xf32>
    %46 = tpu.concatenate %44, %45 in 0 : vector<31x32xf32>, vector<1x32xf32> -> vector<32x32xf32>
    %47 = vector.broadcast %38 : vector<32x1xf32> to vector<32x32xf32>
    %48 = arith.mulf %46, %47 : vector<32x32xf32>
    %49 = vector.extract_strided_slice %30 {offsets = [0, 0], sizes = [1, 32], strides = [1, 1]} : vector<3x32xf32> to vector<1x32xf32>
    %50 = vector.broadcast %49 : vector<1x32xf32> to vector<32x32xf32>
    %51 = arith.mulf %43, %50 : vector<32x32xf32>
    %52 = vector.extract_strided_slice %30 {offsets = [1, 0], sizes = [1, 32], strides = [1, 1]} : vector<3x32xf32> to vector<1x32xf32>
    %53 = vector.broadcast %52 : vector<1x32xf32> to vector<32x32xf32>
    %54 = arith.mulf %29, %53 : vector<32x32xf32>
    %55 = arith.addf %51, %54 : vector<32x32xf32>
    %56 = vector.extract_strided_slice %30 {offsets = [2, 0], sizes = [1, 32], strides = [1, 1]} : vector<3x32xf32> to vector<1x32xf32>
    %57 = vector.broadcast %56 : vector<1x32xf32> to vector<32x32xf32>
    %58 = arith.mulf %48, %57 : vector<32x32xf32>
    %59 = arith.addf %55, %58 : vector<32x32xf32>
    %60 = arith.negf %59 : vector<32x32xf32>
    %61 = math.exp %60 : vector<32x32xf32>
    %cst_12 = arith.constant 1.000000e+00 : f32
    %62 = vector.broadcast %cst_12 : f32 to vector<32x32xf32>
    %63 = arith.addf %62, %61 : vector<32x32xf32>
    %64 = arith.divf %62, %63 : vector<32x32xf32>
    %65 = arith.mulf %59, %64 : vector<32x32xf32>
    %c40 = arith.constant 40 : index
    %c0_13 = arith.constant 0 : index
    %66 = vector.load %arg2[%c40, %c0_13] : memref<528x128xf32, #tpu.memory_space<vmem>>, vector<32x32xf32>
    %c72 = arith.constant 72 : index
    %c0_14 = arith.constant 0 : index
    %67 = vector.load %arg2[%c72, %c0_14] : memref<528x128xf32, #tpu.memory_space<vmem>>, vector<1x32xf32>
    %cst_15 = arith.constant dense<0.000000e+00> : vector<32x32xf32>
    %68 = tpu.matmul %65, %66, %cst_15 {dimension_numbers = #tpu.dot_dimension_numbers<[1], [0], [0], [1], [0, 0, 1, 1], [], []>} : vector<32x32xf32>, vector<32x32xf32>, vector<32x32xf32> -> vector<32x32xf32>
    %69 = vector.broadcast %67 : vector<1x32xf32> to vector<32x32xf32>
    %70 = arith.addf %68, %69 : vector<32x32xf32>
    %cst_16 = arith.constant 2.000000e+01 : f32
    %71 = vector.broadcast %cst_16 : f32 to vector<32x32xf32>
    %72 = arith.minimumf %70, %71 : vector<32x32xf32>
    %cst_17 = arith.constant 2.000000e+01 : f32
    %73 = vector.broadcast %cst_17 : f32 to vector<32x32xf32>
    %74 = arith.cmpf ogt, %70, %73 : vector<32x32xf32>
    %75 = math.exp %72 : vector<32x32xf32>
    %cst_18 = arith.constant 1.000000e+00 : f32
    %76 = vector.broadcast %cst_18 : f32 to vector<32x32xf32>
    %77 = arith.addf %76, %75 : vector<32x32xf32>
    %78 = math.log %77 : vector<32x32xf32>
    %79 = arith.select %74, %70, %78 : vector<32x32xi1>, vector<32x32xf32>
    %c80 = arith.constant 80 : index
    %c0_19 = arith.constant 0 : index
    %80 = vector.load %arg2[%c80, %c0_19] : memref<528x128xf32, #tpu.memory_space<vmem>>, vector<32x128xf32>
    %81 = arith.mulf %79, %65 : vector<32x32xf32>
    %82 = tpu.concatenate %79, %81 in 0 : vector<32x32xf32>, vector<32x32xf32> -> vector<64x32xf32>
    %cst_20 = arith.constant dense<0.000000e+00> : vector<64x128xf32>
    %83 = tpu.matmul %82, %80, %cst_20 {dimension_numbers = #tpu.dot_dimension_numbers<[1], [0], [0], [1], [0, 0, 1, 1], [], []>} : vector<64x32xf32>, vector<32x128xf32>, vector<64x128xf32> -> vector<64x128xf32>
    %84 = vector.extract_strided_slice %83 {offsets = [0, 0], sizes = [32, 128], strides = [1, 1]} : vector<64x128xf32> to vector<32x128xf32>
    %85 = vector.extract_strided_slice %83 {offsets = [32, 0], sizes = [32, 128], strides = [1, 1]} : vector<64x128xf32> to vector<32x128xf32>
    %c112 = arith.constant 112 : index
    %c0_21 = arith.constant 0 : index
    %86 = vector.load %arg2[%c112, %c0_21] : memref<528x128xf32, #tpu.memory_space<vmem>>, vector<32x128xf32>
    %c144 = arith.constant 144 : index
    %c0_22 = arith.constant 0 : index
    %87 = vector.load %arg2[%c144, %c0_22] : memref<528x128xf32, #tpu.memory_space<vmem>>, vector<32x128xf32>
    %88 = tpu.concatenate %86, %87 in 1 : vector<32x128xf32>, vector<32x128xf32> -> vector<32x256xf32>
    %cst_23 = arith.constant dense<0.000000e+00> : vector<32x256xf32>
    %89 = tpu.matmul %65, %88, %cst_23 {dimension_numbers = #tpu.dot_dimension_numbers<[1], [0], [0], [1], [0, 0, 1, 1], [], []>} : vector<32x32xf32>, vector<32x256xf32>, vector<32x256xf32> -> vector<32x256xf32>
    %90 = vector.extract_strided_slice %89 {offsets = [0, 0], sizes = [32, 128], strides = [1, 1]} : vector<32x256xf32> to vector<32x128xf32>
    %91 = vector.extract_strided_slice %89 {offsets = [0, 128], sizes = [32, 128], strides = [1, 1]} : vector<32x256xf32> to vector<32x128xf32>
    %c176 = arith.constant 176 : index
    %c0_24 = arith.constant 0 : index
    %92 = vector.load %arg2[%c176, %c0_24] : memref<528x128xf32, #tpu.memory_space<vmem>>, vector<1x128xf32>
    %93 = vector.broadcast %92 : vector<1x128xf32> to vector<32x128xf32>
    %94 = arith.mulf %84, %93 : vector<32x128xf32>
    %95 = math.exp %94 : vector<32x128xf32>
    %96 = arith.mulf %85, %90 : vector<32x128xf32>
    %c1_i32_25 = arith.constant 1 : i32
    %97 = vector.broadcast %c1_i32_25 : i32 to vector<32x1xi32>
    %98 = arith.cmpi sge, %3, %97 : vector<32x1xi32>
    %99 = arith.extui %98 : vector<32x1xi1> to vector<32x1xi32>
    %100 = arith.sitofp %99 : vector<32x1xi32> to vector<32x1xf32>
    %101 = vector.extract_strided_slice %95 {offsets = [31, 0], sizes = [1, 128], strides = [1, 1]} : vector<32x128xf32> to vector<1x128xf32>
    %102 = vector.extract_strided_slice %95 {offsets = [0, 0], sizes = [31, 128], strides = [1, 1]} : vector<32x128xf32> to vector<31x128xf32>
    %103 = tpu.concatenate %101, %102 in 0 : vector<1x128xf32>, vector<31x128xf32> -> vector<32x128xf32>
    %104 = vector.broadcast %100 : vector<32x1xf32> to vector<32x128xf32>
    %105 = arith.mulf %103, %104 : vector<32x128xf32>
    %cst_26 = arith.constant 1.000000e+00 : f32
    %106 = vector.broadcast %cst_26 : f32 to vector<32x1xf32>
    %107 = arith.subf %106, %100 : vector<32x1xf32>
    %108 = vector.broadcast %107 : vector<32x1xf32> to vector<32x128xf32>
    %109 = arith.addf %105, %108 : vector<32x128xf32>
    %110 = vector.extract_strided_slice %96 {offsets = [31, 0], sizes = [1, 128], strides = [1, 1]} : vector<32x128xf32> to vector<1x128xf32>
    %111 = vector.extract_strided_slice %96 {offsets = [0, 0], sizes = [31, 128], strides = [1, 1]} : vector<32x128xf32> to vector<31x128xf32>
    %112 = tpu.concatenate %110, %111 in 0 : vector<1x128xf32>, vector<31x128xf32> -> vector<32x128xf32>
    %113 = vector.broadcast %100 : vector<32x1xf32> to vector<32x128xf32>
    %114 = arith.mulf %112, %113 : vector<32x128xf32>
    %115 = arith.mulf %95, %114 : vector<32x128xf32>
    %116 = arith.addf %115, %96 : vector<32x128xf32>
    %117 = arith.mulf %95, %109 : vector<32x128xf32>
    %c2_i32 = arith.constant 2 : i32
    %118 = vector.broadcast %c2_i32 : i32 to vector<32x1xi32>
    %119 = arith.cmpi sge, %3, %118 : vector<32x1xi32>
    %120 = arith.extui %119 : vector<32x1xi1> to vector<32x1xi32>
    %121 = arith.sitofp %120 : vector<32x1xi32> to vector<32x1xf32>
    %122 = vector.extract_strided_slice %117 {offsets = [30, 0], sizes = [2, 128], strides = [1, 1]} : vector<32x128xf32> to vector<2x128xf32>
    %123 = vector.extract_strided_slice %117 {offsets = [0, 0], sizes = [30, 128], strides = [1, 1]} : vector<32x128xf32> to vector<30x128xf32>
    %124 = tpu.concatenate %122, %123 in 0 : vector<2x128xf32>, vector<30x128xf32> -> vector<32x128xf32>
    %125 = vector.broadcast %121 : vector<32x1xf32> to vector<32x128xf32>
    %126 = arith.mulf %124, %125 : vector<32x128xf32>
    %cst_27 = arith.constant 1.000000e+00 : f32
    %127 = vector.broadcast %cst_27 : f32 to vector<32x1xf32>
    %128 = arith.subf %127, %121 : vector<32x1xf32>
    %129 = vector.broadcast %128 : vector<32x1xf32> to vector<32x128xf32>
    %130 = arith.addf %126, %129 : vector<32x128xf32>
    %131 = vector.extract_strided_slice %116 {offsets = [30, 0], sizes = [2, 128], strides = [1, 1]} : vector<32x128xf32> to vector<2x128xf32>
    %132 = vector.extract_strided_slice %116 {offsets = [0, 0], sizes = [30, 128], strides = [1, 1]} : vector<32x128xf32> to vector<30x128xf32>
    %133 = tpu.concatenate %131, %132 in 0 : vector<2x128xf32>, vector<30x128xf32> -> vector<32x128xf32>
    %134 = vector.broadcast %121 : vector<32x1xf32> to vector<32x128xf32>
    %135 = arith.mulf %133, %134 : vector<32x128xf32>
    %136 = arith.mulf %117, %135 : vector<32x128xf32>
    %137 = arith.addf %136, %116 : vector<32x128xf32>
    %138 = arith.mulf %117, %130 : vector<32x128xf32>
    %c4_i32 = arith.constant 4 : i32
    %139 = vector.broadcast %c4_i32 : i32 to vector<32x1xi32>
    %140 = arith.cmpi sge, %3, %139 : vector<32x1xi32>
    %141 = arith.extui %140 : vector<32x1xi1> to vector<32x1xi32>
    %142 = arith.sitofp %141 : vector<32x1xi32> to vector<32x1xf32>
    %143 = vector.extract_strided_slice %138 {offsets = [28, 0], sizes = [4, 128], strides = [1, 1]} : vector<32x128xf32> to vector<4x128xf32>
    %144 = vector.extract_strided_slice %138 {offsets = [0, 0], sizes = [28, 128], strides = [1, 1]} : vector<32x128xf32> to vector<28x128xf32>
    %145 = tpu.concatenate %143, %144 in 0 : vector<4x128xf32>, vector<28x128xf32> -> vector<32x128xf32>
    %146 = vector.broadcast %142 : vector<32x1xf32> to vector<32x128xf32>
    %147 = arith.mulf %145, %146 : vector<32x128xf32>
    %cst_28 = arith.constant 1.000000e+00 : f32
    %148 = vector.broadcast %cst_28 : f32 to vector<32x1xf32>
    %149 = arith.subf %148, %142 : vector<32x1xf32>
    %150 = vector.broadcast %149 : vector<32x1xf32> to vector<32x128xf32>
    %151 = arith.addf %147, %150 : vector<32x128xf32>
    %152 = vector.extract_strided_slice %137 {offsets = [28, 0], sizes = [4, 128], strides = [1, 1]} : vector<32x128xf32> to vector<4x128xf32>
    %153 = vector.extract_strided_slice %137 {offsets = [0, 0], sizes = [28, 128], strides = [1, 1]} : vector<32x128xf32> to vector<28x128xf32>
    %154 = tpu.concatenate %152, %153 in 0 : vector<4x128xf32>, vector<28x128xf32> -> vector<32x128xf32>
    %155 = vector.broadcast %142 : vector<32x1xf32> to vector<32x128xf32>
    %156 = arith.mulf %154, %155 : vector<32x128xf32>
    %157 = arith.mulf %138, %156 : vector<32x128xf32>
    %158 = arith.addf %157, %137 : vector<32x128xf32>
    %159 = arith.mulf %138, %151 : vector<32x128xf32>
    %c8_i32 = arith.constant 8 : i32
    %160 = vector.broadcast %c8_i32 : i32 to vector<32x1xi32>
    %161 = arith.cmpi sge, %3, %160 : vector<32x1xi32>
    %162 = arith.extui %161 : vector<32x1xi1> to vector<32x1xi32>
    %163 = arith.sitofp %162 : vector<32x1xi32> to vector<32x1xf32>
    %164 = vector.extract_strided_slice %158 {offsets = [24, 0], sizes = [8, 128], strides = [1, 1]} : vector<32x128xf32> to vector<8x128xf32>
    %165 = vector.extract_strided_slice %158 {offsets = [0, 0], sizes = [24, 128], strides = [1, 1]} : vector<32x128xf32> to vector<24x128xf32>
    %166 = tpu.concatenate %164, %165 in 0 : vector<8x128xf32>, vector<24x128xf32> -> vector<32x128xf32>
    %167 = vector.broadcast %163 : vector<32x1xf32> to vector<32x128xf32>
    %168 = arith.mulf %166, %167 : vector<32x128xf32>
    %169 = arith.mulf %159, %168 : vector<32x128xf32>
    %170 = arith.addf %169, %158 : vector<32x128xf32>
    %171 = arith.mulf %170, %91 : vector<32x128xf32>
    %c216 = arith.constant 216 : index
    %c0_29 = arith.constant 0 : index
    %172 = vector.load %arg2[%c216, %c0_29] : memref<528x128xf32, #tpu.memory_space<vmem>>, vector<128x32xf32>
    %c184 = arith.constant 184 : index
    %c0_30 = arith.constant 0 : index
    %173 = vector.load %arg2[%c184, %c0_30] : memref<528x128xf32, #tpu.memory_space<vmem>>, vector<32x32xf32>
    %cst_31 = arith.constant dense<0.000000e+00> : vector<32x32xf32>
    %174 = tpu.matmul %171, %172, %cst_31 {dimension_numbers = #tpu.dot_dimension_numbers<[1], [0], [0], [1], [0, 0, 1, 1], [], []>} : vector<32x128xf32>, vector<128x32xf32>, vector<32x32xf32> -> vector<32x32xf32>
    %cst_32 = arith.constant dense<0.000000e+00> : vector<32x32xf32>
    %175 = tpu.matmul %65, %173, %cst_32 {dimension_numbers = #tpu.dot_dimension_numbers<[1], [0], [0], [1], [0, 0, 1, 1], [], []>} : vector<32x32xf32>, vector<32x32xf32>, vector<32x32xf32> -> vector<32x32xf32>
    %176 = arith.addf %174, %175 : vector<32x32xf32>
    %177 = arith.addf %0, %176 : vector<32x32xf32>
    %c346 = arith.constant 346 : index
    %c0_33 = arith.constant 0 : index
    %178 = vector.load %arg2[%c346, %c0_33] : memref<528x128xf32, #tpu.memory_space<vmem>>, vector<1x32xf32>
    %c347 = arith.constant 347 : index
    %c0_34 = arith.constant 0 : index
    %179 = vector.load %arg2[%c347, %c0_34] : memref<528x128xf32, #tpu.memory_space<vmem>>, vector<1x32xf32>
    %cst_35 = arith.constant dense<0.000000e+00> : vector<32xf32>
    %180 = vector.multi_reduction <add>, %177, %cst_35 [1] : vector<32x32xf32> to vector<32xf32>
    %181 = vector.shape_cast %180 : vector<32xf32> to vector<32x1xf32>
    %cst_36 = arith.constant 3.200000e+01 : f32
    %182 = vector.broadcast %cst_36 : f32 to vector<32x1xf32>
    %183 = arith.divf %181, %182 : vector<32x1xf32>
    %184 = vector.broadcast %183 : vector<32x1xf32> to vector<32x32xf32>
    %185 = arith.subf %177, %184 : vector<32x32xf32>
    %186 = arith.mulf %185, %185 : vector<32x32xf32>
    %cst_37 = arith.constant dense<0.000000e+00> : vector<32xf32>
    %187 = vector.multi_reduction <add>, %186, %cst_37 [1] : vector<32x32xf32> to vector<32xf32>
    %188 = vector.shape_cast %187 : vector<32xf32> to vector<32x1xf32>
    %cst_38 = arith.constant 3.200000e+01 : f32
    %189 = vector.broadcast %cst_38 : f32 to vector<32x1xf32>
    %190 = arith.divf %188, %189 : vector<32x1xf32>
    %191 = vector.broadcast %183 : vector<32x1xf32> to vector<32x32xf32>
    %192 = arith.subf %177, %191 : vector<32x32xf32>
    %cst_39 = arith.constant 9.99999974E-6 : f32
    %193 = vector.broadcast %cst_39 : f32 to vector<32x1xf32>
    %194 = arith.addf %190, %193 : vector<32x1xf32>
    %195 = math.rsqrt %194 : vector<32x1xf32>
    %196 = vector.broadcast %195 : vector<32x1xf32> to vector<32x32xf32>
    %197 = arith.mulf %192, %196 : vector<32x32xf32>
    %198 = vector.broadcast %178 : vector<1x32xf32> to vector<32x32xf32>
    %199 = arith.mulf %197, %198 : vector<32x32xf32>
    %200 = vector.broadcast %179 : vector<1x32xf32> to vector<32x32xf32>
    %201 = arith.addf %199, %200 : vector<32x32xf32>
    %c352 = arith.constant 352 : index
    %c0_40 = arith.constant 0 : index
    %202 = vector.load %arg2[%c352, %c0_40] : memref<528x128xf32, #tpu.memory_space<vmem>>, vector<32x128xf32>
    %c384 = arith.constant 384 : index
    %c0_41 = arith.constant 0 : index
    %203 = vector.load %arg2[%c384, %c0_41] : memref<528x128xf32, #tpu.memory_space<vmem>>, vector<1x128xf32>
    %cst_42 = arith.constant dense<0.000000e+00> : vector<32x128xf32>
    %204 = tpu.matmul %201, %202, %cst_42 {dimension_numbers = #tpu.dot_dimension_numbers<[1], [0], [0], [1], [0, 0, 1, 1], [], []>} : vector<32x32xf32>, vector<32x128xf32>, vector<32x128xf32> -> vector<32x128xf32>
    %205 = vector.broadcast %203 : vector<1x128xf32> to vector<32x128xf32>
    %206 = arith.addf %204, %205 : vector<32x128xf32>
    %cst_43 = arith.constant 5.000000e-01 : f32
    %207 = vector.broadcast %cst_43 : f32 to vector<32x128xf32>
    %208 = arith.mulf %207, %206 : vector<32x128xf32>
    %cst_44 = arith.constant 4.471500e-02 : f32
    %209 = vector.broadcast %cst_44 : f32 to vector<32x128xf32>
    %210 = arith.mulf %209, %206 : vector<32x128xf32>
    %211 = arith.mulf %210, %206 : vector<32x128xf32>
    %212 = arith.mulf %211, %206 : vector<32x128xf32>
    %213 = arith.addf %206, %212 : vector<32x128xf32>
    %cst_45 = arith.constant 0.797884583 : f32
    %214 = vector.broadcast %cst_45 : f32 to vector<32x128xf32>
    %215 = arith.mulf %214, %213 : vector<32x128xf32>
    %216 = math.tanh %215 : vector<32x128xf32>
    %cst_46 = arith.constant 1.000000e+00 : f32
    %217 = vector.broadcast %cst_46 : f32 to vector<32x128xf32>
    %218 = arith.addf %217, %216 : vector<32x128xf32>
    %219 = arith.mulf %208, %218 : vector<32x128xf32>
    %c392 = arith.constant 392 : index
    %c0_47 = arith.constant 0 : index
    %220 = vector.load %arg2[%c392, %c0_47] : memref<528x128xf32, #tpu.memory_space<vmem>>, vector<128x32xf32>
    %c520 = arith.constant 520 : index
    %c0_48 = arith.constant 0 : index
    %221 = vector.load %arg2[%c520, %c0_48] : memref<528x128xf32, #tpu.memory_space<vmem>>, vector<1x32xf32>
    %cst_49 = arith.constant dense<0.000000e+00> : vector<32x32xf32>
    %222 = tpu.matmul %219, %220, %cst_49 {dimension_numbers = #tpu.dot_dimension_numbers<[1], [0], [0], [1], [0, 0, 1, 1], [], []>} : vector<32x128xf32>, vector<128x32xf32>, vector<32x32xf32> -> vector<32x32xf32>
    %223 = arith.addf %177, %222 : vector<32x32xf32>
    %224 = vector.broadcast %221 : vector<1x32xf32> to vector<32x32xf32>
    %225 = arith.addf %223, %224 : vector<32x32xf32>
    %c0_50 = arith.constant 0 : index
    %c0_51 = arith.constant 0 : index
    %226 = vector.load %arg3[%c0_50, %c0_51] : memref<32x32xf32, #tpu.memory_space<vmem>>, vector<32x32xf32>
    tpu.vector_store %arg3[%c0_50, %c0_51], %225 {strides = array<i32>} : memref<32x32xf32, #tpu.memory_space<vmem>>, vector<32x32xf32>,
    return
  }
  func.func @transform_0(%arg0: i32) -> (i32, i32) {
    %c0_i32 = arith.constant 0 : i32
    %c0_i32_0 = arith.constant 0 : i32
    %c0_i32_1 = arith.constant 0 : i32
    return %c0_i32, %c0_i32_0 : i32, i32
  }
  func.func @transform_1(%arg0: i32) -> (i32, i32) {
    %c0_i32 = arith.constant 0 : i32
    %c0_i32_0 = arith.constant 0 : i32
    %c0_i32_1 = arith.constant 0 : i32
    return %c0_i32, %c0_i32_0 : i32, i32
  }
  func.func @transform_2(%arg0: i32) -> (i32, i32) {
    %c0_i32 = arith.constant 0 : i32
    %c0_i32_0 = arith.constant 0 : i32
    %c0_i32_1 = arith.constant 0 : i32
    return %c0_i32, %c0_i32_0 : i32, i32
  }
}

</mosaic_0001>

<llo_original>
// kernel: block_forward.1
$region0: #{block_forward.1}
  #allocation0 [shape = 'u32[]', space=smem, size = 0x4, offset = 0x4, fixed_abs, tag = 'smem constant byte address 0x4 - core index']
  #allocation1 [shape = 'u32[144,128]{1,0:T(1,128)}', space=vmem, size = 0x12000, scoped, tag = 'internal scratch']
  %s0 = inlined_call_operand.hbm [shape: f32[32,32], index: 0, kind: input, shape index: {}]
  %s1 = inlined_call_operand.hbm [shape: f32[528,128], index: 1, kind: input, shape index: {}]
  %s2 = inlined_call_operand.hbm [shape: f32[32,32], index: 2, kind: output, shape index: {}]
  %s3 = sld [smem:[#allocation0]]
  $region26: #{block_forward.1} parent=0
    _
  %s5 = ssub.s32 1, %s3
  %s6 = scalar_select 0, %s5, %s3
  $region1: #{block_forward.1} parent=0
    #allocation2 [shape = 'u8[16384]{0}', space=vmem, size = 0x4000, scoped, tag = 'input window, operand 0, single buffered']
    #allocation3 [shape = 's32[1]{0}', space=sflag, size = 0x4, scoped, tag = 'scoped memory for block_forward.1']
    #allocation4 [shape = 's32[1]{0}', space=sflag, size = 0x4, scoped, tag = 'scoped memory for block_forward.1']
    #allocation5 [shape = 'u8[270336]{0}', space=vmem, size = 0x42000, scoped, tag = 'input window, operand 1, single buffered']
    #allocation6 [shape = 's32[1]{0}', space=sflag, size = 0x4, scoped, tag = 'scoped memory for block_forward.1']
    #allocation7 [shape = 'u8[16384]{0}', space=vmem, size = 0x4000, scoped, tag = 'output window, operand 0, single buffered']
    %7 = vsyncpa [#allocation3], 0
    %8 = vsyncpa [#allocation6], 0
    %9 = vsyncpa [#allocation4], 0
    // Predicated region
    $region2: #{block_forward.1} parent=1 // pred_check
      _
    $region3: #{block_forward.1} parent=1 // pred_check_branch
      %11 = sbr.rel (0) target = $region5
    $region4: #{block_forward.1} parent=1 // pred_region
      %s13 = ssub.s32 512, 512
      %14 = vsyncadd [#allocation3], %s13
      %s15 = sshll.u32 [#allocation2], 4
      %s16 = int_to_ptr.vmem [resolvable:$true] %s15
      %21 = dma.hbm_to_vmem [thread:$0]  %s0, 512, %s16, [#allocation3], 128, 128, 8
    $region5: #{block_forward.1} parent=1 // pred_fallthru
      _
    // Predicated region
    $region6: #{block_forward.1} parent=1 // pred_check
      _
    $region7: #{block_forward.1} parent=1 // pred_check_branch
      %23 = sbr.rel (0) target = $region9
    $region8: #{block_forward.1} parent=1 // pred_region
      %s25 = ssub.s32 8448, 8448
      %26 = vsyncadd [#allocation6], %s25
      %s27 = sshll.u32 [#allocation5], 4
      %s28 = int_to_ptr.vmem [resolvable:$true] %s27
      %33 = dma.hbm_to_vmem [thread:$0]  %s1, 8448, %s28, [#allocation6], 128, 128, 8
    $region9: #{block_forward.1} parent=1 // pred_fallthru
      _
    // Predicated region
    $region10: #{block_forward.1} parent=1 // pred_check
      _
    $region11: #{block_forward.1} parent=1 // pred_check_branch
      %35 = sbr.rel (0) target = $region13
    $region12: #{block_forward.1} parent=1 // pred_region
      %36 = dma.done [#allocation3], 512
    $region13: #{block_forward.1} parent=1 // pred_fallthru
      _
    // Predicated region
    $region14: #{block_forward.1} parent=1 // pred_check
      _
    $region15: #{block_forward.1} parent=1 // pred_check_branch
      %38 = sbr.rel (0) target = $region17
    $region16: #{block_forward.1} parent=1 // pred_region
      %39 = dma.done [#allocation6], 8448
    $region17: #{block_forward.1} parent=1 // pred_fallthru
      _
    %v40 = vld [vmem:[#allocation2] sm:$0xff]
    %v41 = vld [vmem:[#allocation2 + $0x8] sm:$0xff]
    %v42 = vld [vmem:[#allocation2 + $0x10] sm:$0xff]
    %v43 = vld [vmem:[#allocation2 + $0x18] sm:$0xff]
    %v44 = vlaneseq
    %v45 = vshrl.u32 %v44, 7
    %v46 = vadd.s32 %v45, 8
    %v47 = vadd.s32 %v45, 16
    %v48 = vadd.s32 %v45, 24
    %v49 = vand.u32 %v45, 15
    %v50 = vand.u32 %v46, 15
    %v51 = vand.u32 %v47, 15
    %v52 = vand.u32 %v48, 15
    %v53 = vld [vmem:[#allocation5 + $0x158] sm:$0x1]
    %v54 = vld [vmem:[#allocation5 + $0x159] sm:$0x1]
    %vm55 = vcmask 261120
    %v56 = vsel %vm55, %v40, 0.0
    %57 = vadd.xlane.f32.xlu0 %v56
    %v58 = vpop.xlane.xlu0 %57
    %v59 = vsel %vm55, %v41, 0.0
    %60 = vadd.xlane.f32.xlu0 %v59
    %v61 = vpop.xlane.xlu0 %60
    %v62 = vsel %vm55, %v42, 0.0
    %63 = vadd.xlane.f32.xlu0 %v62
    %v64 = vpop.xlane.xlu0 %63
    %v65 = vsel %vm55, %v43, 0.0
    %66 = vadd.xlane.f32.xlu0 %v65
    %v67 = vpop.xlane.xlu0 %66
    %v68 = vrcp.pop 32.0
    %v69 = vmul.f32 %v58, %v68
    %v70 = vmul.f32 %v61, %v68
    %v71 = vmul.f32 %v64, %v68
    %v72 = vmul.f32 %v67, %v68
    %v73 = vsub.f32 %v40, %v69
    %v74 = vsub.f32 %v41, %v70
    %v75 = vsub.f32 %v42, %v71
    %v76 = vsub.f32 %v43, %v72
    %v77 = vmul.f32 %v73, %v73
    %v78 = vmul.f32 %v74, %v74
    %v79 = vmul.f32 %v75, %v75
    %v80 = vmul.f32 %v76, %v76
    %v81 = vsel %vm55, %v77, 0.0
    %82 = vadd.xlane.f32.xlu0 %v81
    %v83 = vpop.xlane.xlu0 %82
    %v84 = vsel %vm55, %v78, 0.0
    %85 = vadd.xlane.f32.xlu0 %v84
    %v86 = vpop.xlane.xlu0 %85
    %v87 = vsel %vm55, %v79, 0.0
    %88 = vadd.xlane.f32.xlu0 %v87
    %v89 = vpop.xlane.xlu0 %88
    %v90 = vsel %vm55, %v80, 0.0
    %91 = vadd.xlane.f32.xlu0 %v90
    %v92 = vpop.xlane.xlu0 %91
    %v93 = vmul.f32 %v83, %v68
    %v94 = vmul.f32 %v86, %v68
    %v95 = vmul.f32 %v89, %v68
    %v96 = vmul.f32 %v92, %v68
    %v97 = vadd.f32 %v93, 1e-05
    %v98 = vadd.f32 %v94, 1e-05
    %v99 = vadd.f32 %v95, 1e-05
    %v100 = vadd.f32 %v96, 1e-05
    %v101 = vrsqrt.pop %v97
    %v102 = vrsqrt.pop %v98
    %v103 = vrsqrt.pop %v99
    %v104 = vrsqrt.pop %v100
    %v105 = vmul.f32 %v73, %v101
    %v106 = vmul.f32 %v74, %v102
    %v107 = vmul.f32 %v75, %v103
    %v108 = vmul.f32 %v76, %v104
    %v109 = vlaneseq
    %v110 = vshrl.u32 %v109, 7
    %v111 = vsub.s32 0, %v110
    %v112 = vrot.slane %v53, %v111
    %v113 = vmul.f32 %v105, %v112
    %v114 = vmul.f32 %v106, %v112
    %v115 = vmul.f32 %v107, %v112
    %v116 = vmul.f32 %v108, %v112
    %v117 = vlaneseq
    %v118 = vshrl.u32 %v117, 7
    %v119 = vsub.s32 0, %v118
    %v120 = vrot.slane %v54, %v119
    %v121 = vadd.f32 %v113, %v120
    %v122 = vadd.f32 %v114, %v120
    %v123 = vadd.f32 %v115, %v120
    %v124 = vadd.f32 %v116, %v120
    %v125 = vld [vmem:[#allocation5] sm:$0xff]
    %v126 = vld [vmem:[#allocation5 + $0x8] sm:$0xff]
    %v127 = vld [vmem:[#allocation5 + $0x10] sm:$0xff]
    %v128 = vld [vmem:[#allocation5 + $0x18] sm:$0xff]
    %v130 = vsel %vm55, %v121, 0
    %v133 = vsel %vm55, %v122, 0
    %v136 = vsel %vm55, %v123, 0
    %v139 = vsel %vm55, %v124, 0
    %141 = vmatprep.subr.mxu0 0.0
    %142 = vmatpush1.msra.mxu0 %v125
    %143 = vmatprep.subr.mxu0 0.0
    %144 = vmatpush1.msra.mxu0 %v126
    %145 = vmatprep.subr.mxu0 0.0
    %146 = vmatpush1.msra.mxu0 %v127
    %147 = vmatprep.subr.mxu0 0.0
    %148 = vmatpush1.msra.mxu0 %v128
    %149 = vmatprep.subr.mxu0 0.0
    %150 = vmatpush1.msra.mxu0 0.0
    %151 = vmatprep.subr.mxu0 0.0
    %152 = vmatpush1.msra.mxu0 0.0
    %153 = vmatprep.subr.mxu0 0.0
    %154 = vmatpush1.msra.mxu0 0.0
    %155 = vmatprep.subr.mxu0 0.0
    %156 = vmatpush1.msra.mxu0 0.0
    %157 = vmatprep.subr.mxu0 0.0
    %158 = vmatpush1.msra.mxu0 0.0
    %159 = vmatprep.subr.mxu0 0.0
    %160 = vmatpush1.msra.mxu0 0.0
    %161 = vmatprep.subr.mxu0 0.0
    %162 = vmatpush1.msra.mxu0 0.0
    %163 = vmatprep.subr.mxu0 0.0
    %164 = vmatpush1.msra.mxu0 0.0
    %165 = vmatprep.subr.mxu0 0.0
    %166 = vmatpush1.msra.mxu0 0.0
    %167 = vmatprep.subr.mxu0 0.0
    %168 = vmatpush1.msra.mxu0 0.0
    %169 = vmatprep.subr.mxu0 0.0
    %170 = vmatpush1.msra.mxu0 0.0
    %171 = vmatprep.subr.mxu0 0.0
    %172 = vmatpush1.msra.mxu0 0.0
    %173 = vmatprep.subr.mxu0 0.0
    %174 = vmatpush1.msra.mxu0 0.0
    %175 = vmatprep.subr.mxu0 0.0
    %176 = vmatpush1.msra.mxu0 0.0
    %177 = vmatprep.subr.mxu0 0.0
    %178 = vmatpush1.msra.mxu0 0.0
    %179 = vmatprep.subr.mxu0 0.0
    %180 = vmatpush1.msra.mxu0 0.0
    %181 = vmatprep.subr.mxu0 0.0
    %182 = vmatpush1.msra.mxu0 0.0
    %183 = vmatprep.subr.mxu0 0.0
    %184 = vmatpush1.msra.mxu0 0.0
    %185 = vmatprep.subr.mxu0 0.0
    %186 = vmatpush1.msra.mxu0 0.0
    %187 = vmatprep.subr.mxu0 0.0
    %188 = vmatpush1.msra.mxu0 0.0
    %189 = vmatprep.subr.mxu0 0.0
    %190 = vmatpush1.msra.mxu0 0.0
    %191 = vmatprep.subr.mxu0 0.0
    %192 = vmatpush1.msra.mxu0 0.0
    %193 = vmatprep.subr.mxu0 0.0
    %194 = vmatpush1.msra.mxu0 0.0
    %195 = vmatprep.subr.mxu0 0.0
    %196 = vmatpush1.msra.mxu0 0.0
    %197 = vmatprep.subr.mxu0 0.0
    %198 = vmatpush1.msra.mxu0 0.0
    %199 = vmatprep.subr.mxu0 0.0
    %200 = vmatpush1.msra.mxu0 0.0
    %201 = vmatprep.subr.mxu0 0.0
    %202 = vmatpush1.msra.mxu0 0.0
    %203 = vmatprep.subr.mxu0 0.0
    %204 = vmatpush1.msra.mxu0 0.0
    %205 = vmatprep.mubr.f32.mxu0 0.0
    %206 = vmatmul.mubr.f32.gmra.mrb[0].mxu0 %v130
    %v207 = vpop.f32.mrb[0].mxu0
    %v208 = vadd.f32 0.0, %v207
    %v209 = vpop.f32.mrb[0].mxu0
    %210 = vmatprep.mubr.f32.mxu0 0.0
    %211 = vmatmul.mubr.f32.gmra.mrb[0].mxu0 %v133
    %v212 = vpop.f32.mrb[0].mxu0
    %v213 = vadd.f32 0.0, %v212
    %v214 = vpop.f32.mrb[0].mxu0
    %215 = vmatprep.mubr.f32.mxu0 0.0
    %216 = vmatmul.mubr.f32.gmra.mrb[0].mxu0 %v136
    %v217 = vpop.f32.mrb[0].mxu0
    %v218 = vadd.f32 0.0, %v217
    %v219 = vpop.f32.mrb[0].mxu0
    %220 = vmatprep.mubr.f32.mxu0 0.0
    %221 = vmatmul.mubr.f32.gmra.mrb[0].mxu0 %v139
    %v222 = vpop.f32.mrb[0].mxu0
    %v223 = vadd.f32 0.0, %v222
    %v224 = vpop.f32.mrb[0].mxu0
    %225 = vdwg.mxu0
    %v226 = vld [vmem:[#allocation5 + $0x20] sm:$0x7]
    %vm227 = vcmp.ge.s32.totalorder %v49, 1
    %vm228 = vcmp.ge.s32.totalorder %v50, 1
    %vm229 = vcmp.ge.s32.totalorder %v51, 1
    %vm230 = vcmp.ge.s32.totalorder %v52, 1
    %v231 = vsel %vm227, 1, 0
    %v232 = vsel %vm228, 1, 0
    %v233 = vsel %vm229, 1, 0
    %v234 = vsel %vm230, 1, 0
    %v235 = vcvt.s32.f32 %v231
    %v236 = vcvt.s32.f32 %v232
    %v237 = vcvt.s32.f32 %v233
    %v238 = vcvt.s32.f32 %v234
    %vm239 = vcmp.lt.s32.totalorder %v49, 15
    %vm240 = vcmp.lt.s32.totalorder %v50, 15
    %vm241 = vcmp.lt.s32.totalorder %v51, 15
    %vm242 = vcmp.lt.s32.totalorder %v52, 15
    %v243 = vsel %vm239, 1, 0
    %v244 = vsel %vm240, 1, 0
    %v245 = vsel %vm241, 1, 0
    %v246 = vsel %vm242, 1, 0
    %v247 = vcvt.s32.f32 %v243
    %v248 = vcvt.s32.f32 %v244
    %v249 = vcvt.s32.f32 %v245
    %v250 = vcvt.s32.f32 %v246
    %v252 = vrot.slane %v223, 7
    %vm257 = vcmask 1040384
    %v258 = vrot.slane %v208, 7
    %v259 = vrot.slane %v213, 7
    %v260 = vsel %vm257, %v258, %v259
    %v261 = vrot.slane %v218, 7
    %v262 = vsel %vm257, %v259, %v261
    %v263 = vsel %vm257, %v261, %v252
    %v268 = vsel %vm257, %v252, %v258
    %v269 = vmul.f32 %v268, %v235
    %v270 = vmul.f32 %v260, %v236
    %v271 = vmul.f32 %v262, %v237
    %v272 = vmul.f32 %v263, %v238
    %vm273 = vcmask 1046528
    %v274 = vrot.slane %v208, 1
    %v275 = vrot.slane %v213, 1
    %v276 = vsel %vm273, %v274, %v275
    %v277 = vrot.slane %v218, 1
    %v278 = vsel %vm273, %v275, %v277
    %v279 = vrot.slane %v223, 1
    %v280 = vsel %vm273, %v277, %v279
    %v286 = vsel %vm273, %v279, %v274
    %v287 = vmul.f32 %v276, %v247
    %v288 = vmul.f32 %v278, %v248
    %v289 = vmul.f32 %v280, %v249
    %v290 = vmul.f32 %v286, %v250
    %v291 = vlaneseq
    %v292 = vshrl.u32 %v291, 7
    %v293 = vsub.s32 0, %v292
    %v294 = vrot.slane %v226, %v293
    %v295 = vmul.f32 %v269, %v294
    %v296 = vmul.f32 %v270, %v294
    %v297 = vmul.f32 %v271, %v294
    %v298 = vmul.f32 %v272, %v294
    %v299 = vlaneseq
    %v300 = vshrl.u32 %v299, 7
    %v301 = vsub.s32 1, %v300
    %v302 = vrot.slane %v226, %v301
    %v303 = vmul.f32 %v208, %v302
    %v304 = vmul.f32 %v213, %v302
    %v305 = vmul.f32 %v218, %v302
    %v306 = vmul.f32 %v223, %v302
    %v307 = vadd.f32 %v295, %v303
    %v308 = vadd.f32 %v296, %v304
    %v309 = vadd.f32 %v297, %v305
    %v310 = vadd.f32 %v298, %v306
    %v311 = vlaneseq
    %v312 = vshrl.u32 %v311, 7
    %v313 = vsub.s32 2, %v312
    %v314 = vrot.slane %v226, %v313
    %v315 = vmul.f32 %v287, %v314
    %v316 = vmul.f32 %v288, %v314
    %v317 = vmul.f32 %v289, %v314
    %v318 = vmul.f32 %v290, %v314
    %v319 = vadd.f32 %v307, %v315
    %v320 = vadd.f32 %v308, %v316
    %v321 = vadd.f32 %v309, %v317
    %v322 = vadd.f32 %v310, %v318
    %v323 = vxor.u32 %v319, 2147483648
    %v324 = vxor.u32 %v320, 2147483648
    %v325 = vxor.u32 %v321, 2147483648
    %v326 = vxor.u32 %v322, 2147483648
    %v327 = vmul.f32 %v323, 1.442695
    %v328 = vpow.pop %v327
    %v329 = vmul.f32 %v324, 1.442695
    %v330 = vpow.pop %v329
    %v331 = vmul.f32 %v325, 1.442695
    %v332 = vpow.pop %v331
    %v333 = vmul.f32 %v326, 1.442695
    %v334 = vpow.pop %v333
    %v335 = vadd.f32 %v328, 1.0
    %v336 = vadd.f32 %v330, 1.0
    %v337 = vadd.f32 %v332, 1.0
    %v338 = vadd.f32 %v334, 1.0
    %v339 = vrcp.pop %v335
    %v340 = vmul.f32 1.0, %v339
    %v341 = vrcp.pop %v336
    %v342 = vmul.f32 1.0, %v341
    %v343 = vrcp.pop %v337
    %v344 = vmul.f32 1.0, %v343
    %v345 = vrcp.pop %v338
    %v346 = vmul.f32 1.0, %v345
    %v347 = vmul.f32 %v319, %v340
    %v348 = vmul.f32 %v320, %v342
    %v349 = vmul.f32 %v321, %v344
    %v350 = vmul.f32 %v322, %v346
    %v351 = vld [vmem:[#allocation5 + $0x28] sm:$0xff]
    %v352 = vld [vmem:[#allocation5 + $0x30] sm:$0xff]
    %v353 = vld [vmem:[#allocation5 + $0x38] sm:$0xff]
    %v354 = vld [vmem:[#allocation5 + $0x40] sm:$0xff]
    %v355 = vld [vmem:[#allocation5 + $0x48] sm:$0x1]
    %v356 = vlaneseq
    %v357 = vshrl.u32 %v356, 7
    %v358 = vsub.s32 0, %v357
    %v359 = vrot.slane %v355, %v358
    %v361 = vsel %vm55, %v347, 0
    %v364 = vsel %vm55, %v348, 0
    %v367 = vsel %vm55, %v349, 0
    %v370 = vsel %vm55, %v350, 0
    %372 = vmatprep.subr.mxu0 0.0
    %373 = vmatpush1.msra.mxu0 %v351
    %374 = vmatprep.subr.mxu0 0.0
    %375 = vmatpush1.msra.mxu0 %v352
    %376 = vmatprep.subr.mxu0 0.0
    %377 = vmatpush1.msra.mxu0 %v353
    %378 = vmatprep.subr.mxu0 0.0
    %379 = vmatpush1.msra.mxu0 %v354
    %380 = vmatprep.subr.mxu0 0.0
    %381 = vmatpush1.msra.mxu0 0.0
    %382 = vmatprep.subr.mxu0 0.0
    %383 = vmatpush1.msra.mxu0 0.0
    %384 = vmatprep.subr.mxu0 0.0
    %385 = vmatpush1.msra.mxu0 0.0
    %386 = vmatprep.subr.mxu0 0.0
    %387 = vmatpush1.msra.mxu0 0.0
    %388 = vmatprep.subr.mxu0 0.0
    %389 = vmatpush1.msra.mxu0 0.0
    %390 = vmatprep.subr.mxu0 0.0
    %391 = vmatpush1.msra.mxu0 0.0
    %392 = vmatprep.subr.mxu0 0.0
    %393 = vmatpush1.msra.mxu0 0.0
    %394 = vmatprep.subr.mxu0 0.0
    %395 = vmatpush1.msra.mxu0 0.0
    %396 = vmatprep.subr.mxu0 0.0
    %397 = vmatpush1.msra.mxu0 0.0
    %398 = vmatprep.subr.mxu0 0.0
    %399 = vmatpush1.msra.mxu0 0.0
    %400 = vmatprep.subr.mxu0 0.0
    %401 = vmatpush1.msra.mxu0 0.0
    %402 = vmatprep.subr.mxu0 0.0
    %403 = vmatpush1.msra.mxu0 0.0
    %404 = vmatprep.subr.mxu0 0.0
    %405 = vmatpush1.msra.mxu0 0.0
    %406 = vmatprep.subr.mxu0 0.0
    %407 = vmatpush1.msra.mxu0 0.0
    %408 = vmatprep.subr.mxu0 0.0
    %409 = vmatpush1.msra.mxu0 0.0
    %410 = vmatprep.subr.mxu0 0.0
    %411 = vmatpush1.msra.mxu0 0.0
    %412 = vmatprep.subr.mxu0 0.0
    %413 = vmatpush1.msra.mxu0 0.0
    %414 = vmatprep.subr.mxu0 0.0
    %415 = vmatpush1.msra.mxu0 0.0
    %416 = vmatprep.subr.mxu0 0.0
    %417 = vmatpush1.msra.mxu0 0.0
    %418 = vmatprep.subr.mxu0 0.0
    %419 = vmatpush1.msra.mxu0 0.0
    %420 = vmatprep.subr.mxu0 0.0
    %421 = vmatpush1.msra.mxu0 0.0
    %422 = vmatprep.subr.mxu0 0.0
    %423 = vmatpush1.msra.mxu0 0.0
    %424 = vmatprep.subr.mxu0 0.0
    %425 = vmatpush1.msra.mxu0 0.0
    %426 = vmatprep.subr.mxu0 0.0
    %427 = vmatpush1.msra.mxu0 0.0
    %428 = vmatprep.subr.mxu0 0.0
    %429 = vmatpush1.msra.mxu0 0.0
    %430 = vmatprep.subr.mxu0 0.0
    %431 = vmatpush1.msra.mxu0 0.0
    %432 = vmatprep.subr.mxu0 0.0
    %433 = vmatpush1.msra.mxu0 0.0
    %434 = vmatprep.subr.mxu0 0.0
    %435 = vmatpush1.msra.mxu0 0.0
    %436 = vmatprep.mubr.f32.mxu0 0.0
    %437 = vmatmul.mubr.f32.gmra.mrb[0].mxu0 %v361
    %v438 = vpop.f32.mrb[0].mxu0
    %v439 = vadd.f32 %v359, %v438
    %v440 = vpop.f32.mrb[0].mxu0
    %441 = vmatprep.mubr.f32.mxu0 0.0
    %442 = vmatmul.mubr.f32.gmra.mrb[0].mxu0 %v364
    %v443 = vpop.f32.mrb[0].mxu0
    %v444 = vadd.f32 %v359, %v443
    %v445 = vpop.f32.mrb[0].mxu0
    %446 = vmatprep.mubr.f32.mxu0 0.0
    %447 = vmatmul.mubr.f32.gmra.mrb[0].mxu0 %v367
    %v448 = vpop.f32.mrb[0].mxu0
    %v449 = vadd.f32 %v359, %v448
    %v450 = vpop.f32.mrb[0].mxu0
    %451 = vmatprep.mubr.f32.mxu0 0.0
    %452 = vmatmul.mubr.f32.gmra.mrb[0].mxu0 %v370
    %v453 = vpop.f32.mrb[0].mxu0
    %v454 = vadd.f32 %v359, %v453
    %v455 = vpop.f32.mrb[0].mxu0
    %456 = vdwg.mxu0
    %v457 = vmin.f32 %v439, 20.0
    %v458 = vmin.f32 %v444, 20.0
    %v459 = vmin.f32 %v449, 20.0
    %v460 = vmin.f32 %v454, 20.0
    %vm461 = vcmp.gt.f32.partialorder %v439, 20.0
    %vm462 = vcmp.gt.f32.partialorder %v444, 20.0
    %vm463 = vcmp.gt.f32.partialorder %v449, 20.0
    %vm464 = vcmp.gt.f32.partialorder %v454, 20.0
    %v465 = vmul.f32 %v457, 1.442695
    %v466 = vpow.pop %v465
    %v467 = vmul.f32 %v458, 1.442695
    %v468 = vpow.pop %v467
    %v469 = vmul.f32 %v459, 1.442695
    %v470 = vpow.pop %v469
    %v471 = vmul.f32 %v460, 1.442695
    %v472 = vpow.pop %v471
    %v473 = vadd.f32 %v466, 1.0
    %v474 = vadd.f32 %v468, 1.0
    %v475 = vadd.f32 %v470, 1.0
    %v476 = vadd.f32 %v472, 1.0
    %v477 = vlog2.pop %v473
    %v478 = vmul.f32 %v477, 0.6931472
    %v479 = vlog2.pop %v474
    %v480 = vmul.f32 %v479, 0.6931472
    %v481 = vlog2.pop %v475
    %v482 = vmul.f32 %v481, 0.6931472
    %v483 = vlog2.pop %v476
    %v484 = vmul.f32 %v483, 0.6931472
    %v485 = vsel %vm461, %v439, %v478
    %v486 = vsel %vm462, %v444, %v480
    %v487 = vsel %vm463, %v449, %v482
    %v488 = vsel %vm464, %v454, %v484
    %v489 = vld [vmem:[#allocation5 + $0x50] sm:$0xff]
    %v490 = vld [vmem:[#allocation5 + $0x58] sm:$0xff]
    %v491 = vld [vmem:[#allocation5 + $0x60] sm:$0xff]
    %v492 = vld [vmem:[#allocation5 + $0x68] sm:$0xff]
    %v493 = vmul.f32 %v485, %v347
    %v494 = vmul.f32 %v486, %v348
    %v495 = vmul.f32 %v487, %v349
    %v496 = vmul.f32 %v488, %v350
    %v498 = vsel %vm55, %v485, 0
    %v501 = vsel %vm55, %v486, 0
    %v504 = vsel %vm55, %v487, 0
    %v507 = vsel %vm55, %v488, 0
    %v510 = vsel %vm55, %v493, 0
    %v513 = vsel %vm55, %v494, 0
    %v516 = vsel %vm55, %v495, 0
    %v519 = vsel %vm55, %v496, 0
    %521 = vmatprep.subr.mxu0 0.0
    %522 = vmatpush1.msra.mxu0 %v489
    %523 = vmatprep.subr.mxu0 0.0
    %524 = vmatpush1.msra.mxu0 %v490
    %525 = vmatprep.subr.mxu0 0.0
    %526 = vmatpush1.msra.mxu0 %v491
    %527 = vmatprep.subr.mxu0 0.0
    %528 = vmatpush1.msra.mxu0 %v492
    %529 = vmatprep.subr.mxu0 0.0
    %530 = vmatpush1.msra.mxu0 0.0
    %531 = vmatprep.subr.mxu0 0.0
    %532 = vmatpush1.msra.mxu0 0.0
    %533 = vmatprep.subr.mxu0 0.0
    %534 = vmatpush1.msra.mxu0 0.0
    %535 = vmatprep.subr.mxu0 0.0
    %536 = vmatpush1.msra.mxu0 0.0
    %537 = vmatprep.subr.mxu0 0.0
    %538 = vmatpush1.msra.mxu0 0.0
    %539 = vmatprep.subr.mxu0 0.0
    %540 = vmatpush1.msra.mxu0 0.0
    %541 = vmatprep.subr.mxu0 0.0
    %542 = vmatpush1.msra.mxu0 0.0
    %543 = vmatprep.subr.mxu0 0.0
    %544 = vmatpush1.msra.mxu0 0.0
    %545 = vmatprep.subr.mxu0 0.0
    %546 = vmatpush1.msra.mxu0 0.0
    %547 = vmatprep.subr.mxu0 0.0
    %548 = vmatpush1.msra.mxu0 0.0
    %549 = vmatprep.subr.mxu0 0.0
    %550 = vmatpush1.msra.mxu0 0.0
    %551 = vmatprep.subr.mxu0 0.0
    %552 = vmatpush1.msra.mxu0 0.0
    %553 = vmatprep.subr.mxu0 0.0
    %554 = vmatpush1.msra.mxu0 0.0
    %555 = vmatprep.subr.mxu0 0.0
    %556 = vmatpush1.msra.mxu0 0.0
    %557 = vmatprep.subr.mxu0 0.0
    %558 = vmatpush1.msra.mxu0 0.0
    %559 = vmatprep.subr.mxu0 0.0
    %560 = vmatpush1.msra.mxu0 0.0
    %561 = vmatprep.subr.mxu0 0.0
    %562 = vmatpush1.msra.mxu0 0.0
    %563 = vmatprep.subr.mxu0 0.0
    %564 = vmatpush1.msra.mxu0 0.0
    %565 = vmatprep.subr.mxu0 0.0
    %566 = vmatpush1.msra.mxu0 0.0
    %567 = vmatprep.subr.mxu0 0.0
    %568 = vmatpush1.msra.mxu0 0.0
    %569 = vmatprep.subr.mxu0 0.0
    %570 = vmatpush1.msra.mxu0 0.0
    %571 = vmatprep.subr.mxu0 0.0
    %572 = vmatpush1.msra.mxu0 0.0
    %573 = vmatprep.subr.mxu0 0.0
    %574 = vmatpush1.msra.mxu0 0.0
    %575 = vmatprep.subr.mxu0 0.0
    %576 = vmatpush1.msra.mxu0 0.0
    %577 = vmatprep.subr.mxu0 0.0
    %578 = vmatpush1.msra.mxu0 0.0
    %579 = vmatprep.subr.mxu0 0.0
    %580 = vmatpush1.msra.mxu0 0.0
    %581 = vmatprep.subr.mxu0 0.0
    %582 = vmatpush1.msra.mxu0 0.0
    %583 = vmatprep.subr.mxu0 0.0
    %584 = vmatpush1.msra.mxu0 0.0
    %585 = vmatprep.mubr.f32.mxu0 0.0
    %586 = vmatmul.mubr.f32.gmra.mrb[0].mxu0 %v498
    %v587 = vpop.f32.mrb[0].mxu0
    %v588 = vadd.f32 0.0, %v587
    %v589 = vpop.f32.mrb[0].mxu0
    %590 = vmatprep.mubr.f32.mxu0 0.0
    %591 = vmatmul.mubr.f32.gmra.mrb[0].mxu0 %v501
    %v592 = vpop.f32.mrb[0].mxu0
    %v593 = vadd.f32 0.0, %v592
    %v594 = vpop.f32.mrb[0].mxu0
    %595 = vmatprep.mubr.f32.mxu0 0.0
    %596 = vmatmul.mubr.f32.gmra.mrb[0].mxu0 %v504
    %v597 = vpop.f32.mrb[0].mxu0
    %v598 = vadd.f32 0.0, %v597
    %v599 = vpop.f32.mrb[0].mxu0
    %600 = vmatprep.mubr.f32.mxu0 0.0
    %601 = vmatmul.mubr.f32.gmra.mrb[0].mxu0 %v507
    %v602 = vpop.f32.mrb[0].mxu0
    %v603 = vadd.f32 0.0, %v602
    %v604 = vpop.f32.mrb[0].mxu0
    %605 = vmatprep.mubr.f32.mxu0 0.0
    %606 = vmatmul.mubr.f32.gmra.mrb[0].mxu0 %v510
    %v607 = vpop.f32.mrb[0].mxu0
    %v608 = vadd.f32 0.0, %v607
    %v609 = vpop.f32.mrb[0].mxu0
    %610 = vmatprep.mubr.f32.mxu0 0.0
    %611 = vmatmul.mubr.f32.gmra.mrb[0].mxu0 %v513
    %v612 = vpop.f32.mrb[0].mxu0
    %v613 = vadd.f32 0.0, %v612
    %v614 = vpop.f32.mrb[0].mxu0
    %615 = vmatprep.mubr.f32.mxu0 0.0
    %616 = vmatmul.mubr.f32.gmra.mrb[0].mxu0 %v516
    %v617 = vpop.f32.mrb[0].mxu0
    %v618 = vadd.f32 0.0, %v617
    %v619 = vpop.f32.mrb[0].mxu0
    %620 = vmatprep.mubr.f32.mxu0 0.0
    %621 = vmatmul.mubr.f32.gmra.mrb[0].mxu0 %v519
    %v622 = vpop.f32.mrb[0].mxu0
    %v623 = vadd.f32 0.0, %v622
    %v624 = vpop.f32.mrb[0].mxu0
    %625 = vdwg.mxu0
    %v626 = vld [vmem:[#allocation5 + $0x70] sm:$0xff]
    %v627 = vld [vmem:[#allocation5 + $0x78] sm:$0xff]
    %v628 = vld [vmem:[#allocation5 + $0x80] sm:$0xff]
    %v629 = vld [vmem:[#allocation5 + $0x88] sm:$0xff]
    %v630 = vld [vmem:[#allocation5 + $0x90] sm:$0xff]
    %v631 = vld [vmem:[#allocation5 + $0x98] sm:$0xff]
    %v632 = vld [vmem:[#allocation5 + $0xa0] sm:$0xff]
    %v633 = vld [vmem:[#allocation5 + $0xa8] sm:$0xff]
    %634 = vmatprep.subr.mxu0 %v630
    %635 = vmatpush1.msra.mxu0 %v626
    %636 = vmatprep.subr.mxu0 %v631
    %637 = vmatpush1.msra.mxu0 %v627
    %638 = vmatprep.subr.mxu0 %v632
    %639 = vmatpush1.msra.mxu0 %v628
    %640 = vmatprep.subr.mxu0 %v633
    %641 = vmatpush1.msra.mxu0 %v629
    %642 = vmatprep.subr.mxu0 0.0
    %643 = vmatpush1.msra.mxu0 0.0
    %644 = vmatprep.subr.mxu0 0.0
    %645 = vmatpush1.msra.mxu0 0.0
    %646 = vmatprep.subr.mxu0 0.0
    %647 = vmatpush1.msra.mxu0 0.0
    %648 = vmatprep.subr.mxu0 0.0
    %649 = vmatpush1.msra.mxu0 0.0
    %650 = vmatprep.subr.mxu0 0.0
    %651 = vmatpush1.msra.mxu0 0.0
    %652 = vmatprep.subr.mxu0 0.0
    %653 = vmatpush1.msra.mxu0 0.0
    %654 = vmatprep.subr.mxu0 0.0
    %655 = vmatpush1.msra.mxu0 0.0
    %656 = vmatprep.subr.mxu0 0.0
    %657 = vmatpush1.msra.mxu0 0.0
    %658 = vmatprep.subr.mxu0 0.0
    %659 = vmatpush1.msra.mxu0 0.0
    %660 = vmatprep.subr.mxu0 0.0
    %661 = vmatpush1.msra.mxu0 0.0
    %662 = vmatprep.subr.mxu0 0.0
    %663 = vmatpush1.msra.mxu0 0.0
    %664 = vmatprep.subr.mxu0 0.0
    %665 = vmatpush1.msra.mxu0 0.0
    %666 = vmatprep.subr.mxu0 0.0
    %667 = vmatpush1.msra.mxu0 0.0
    %668 = vmatprep.subr.mxu0 0.0
    %669 = vmatpush1.msra.mxu0 0.0
    %670 = vmatprep.subr.mxu0 0.0
    %671 = vmatpush1.msra.mxu0 0.0
    %672 = vmatprep.subr.mxu0 0.0
    %673 = vmatpush1.msra.mxu0 0.0
    %674 = vmatprep.subr.mxu0 0.0
    %675 = vmatpush1.msra.mxu0 0.0
    %676 = vmatprep.subr.mxu0 0.0
    %677 = vmatpush1.msra.mxu0 0.0
    %678 = vmatprep.subr.mxu0 0.0
    %679 = vmatpush1.msra.mxu0 0.0
    %680 = vmatprep.subr.mxu0 0.0
    %681 = vmatpush1.msra.mxu0 0.0
    %682 = vmatprep.subr.mxu0 0.0
    %683 = vmatpush1.msra.mxu0 0.0
    %684 = vmatprep.subr.mxu0 0.0
    %685 = vmatpush1.msra.mxu0 0.0
    %686 = vmatprep.subr.mxu0 0.0
    %687 = vmatpush1.msra.mxu0 0.0
    %688 = vmatprep.subr.mxu0 0.0
    %689 = vmatpush1.msra.mxu0 0.0
    %690 = vmatprep.subr.mxu0 0.0
    %691 = vmatpush1.msra.mxu0 0.0
    %692 = vmatprep.subr.mxu0 0.0
    %693 = vmatpush1.msra.mxu0 0.0
    %694 = vmatprep.subr.mxu0 0.0
    %695 = vmatpush1.msra.mxu0 0.0
    %696 = vmatprep.subr.mxu0 0.0
    %697 = vmatpush1.msra.mxu0 0.0
    %698 = vmatprep.mubr.f32.mxu0 0.0
    %699 = vmatmul.mubr.f32.gmra.mrb[0].mxu0 %v361
    %v700 = vpop.f32.mrb[0].mxu0
    %v701 = vadd.f32 0.0, %v700
    %v702 = vpop.f32.mrb[0].mxu0
    %v703 = vadd.f32 0.0, %v702
    %704 = vmatprep.mubr.f32.mxu0 0.0
    %705 = vmatmul.mubr.f32.gmra.mrb[0].mxu0 %v364
    %v706 = vpop.f32.mrb[0].mxu0
    %v707 = vadd.f32 0.0, %v706
    %v708 = vpop.f32.mrb[0].mxu0
    %v709 = vadd.f32 0.0, %v708
    %710 = vmatprep.mubr.f32.mxu0 0.0
    %711 = vmatmul.mubr.f32.gmra.mrb[0].mxu0 %v367
    %v712 = vpop.f32.mrb[0].mxu0
    %v713 = vadd.f32 0.0, %v712
    %v714 = vpop.f32.mrb[0].mxu0
    %v715 = vadd.f32 0.0, %v714
    %716 = vmatprep.mubr.f32.mxu0 0.0
    %717 = vmatmul.mubr.f32.gmra.mrb[0].mxu0 %v370
    %v718 = vpop.f32.mrb[0].mxu0
    %v719 = vadd.f32 0.0, %v718
    %v720 = vpop.f32.mrb[0].mxu0
    %v721 = vadd.f32 0.0, %v720
    %722 = vdwg.mxu0
    %v723 = vld [vmem:[#allocation5 + $0xb0] sm:$0x1]
    %v724 = vlaneseq
    %v725 = vshrl.u32 %v724, 7
    %v726 = vsub.s32 0, %v725
    %v727 = vrot.slane %v723, %v726
    %v728 = vmul.f32 %v588, %v727
    %v729 = vmul.f32 %v593, %v727
    %v730 = vmul.f32 %v598, %v727
    %v731 = vmul.f32 %v603, %v727
    %v732 = vmul.f32 %v728, 1.442695
    %v733 = vpow.pop %v732
    %v734 = vmul.f32 %v729, 1.442695
    %v735 = vpow.pop %v734
    %v736 = vmul.f32 %v730, 1.442695
    %v737 = vpow.pop %v736
    %v738 = vmul.f32 %v731, 1.442695
    %v739 = vpow.pop %v738
    %v740 = vmul.f32 %v608, %v701
    %v741 = vmul.f32 %v613, %v707
    %v742 = vmul.f32 %v618, %v713
    %v743 = vmul.f32 %v623, %v719
    %v745 = vrot.slane %v739, 7
    %v750 = vrot.slane %v733, 7
    %v751 = vrot.slane %v735, 7
    %v752 = vsel %vm257, %v750, %v751
    %v753 = vrot.slane %v737, 7
    %v754 = vsel %vm257, %v751, %v753
    %v755 = vsel %vm257, %v753, %v745
    %v760 = vsel %vm257, %v745, %v750
    %v761 = vmul.f32 %v760, %v235
    %v762 = vmul.f32 %v752, %v236
    %v763 = vmul.f32 %v754, %v237
    %v764 = vmul.f32 %v755, %v238
    %v765 = vsub.f32 1.0, %v235
    %v766 = vsub.f32 1.0, %v236
    %v767 = vsub.f32 1.0, %v237
    %v768 = vsub.f32 1.0, %v238
    %v769 = vadd.f32 %v761, %v765
    %v770 = vadd.f32 %v762, %v766
    %v771 = vadd.f32 %v763, %v767
    %v772 = vadd.f32 %v764, %v768
    %v774 = vrot.slane %v743, 7
    %v779 = vrot.slane %v740, 7
    %v780 = vrot.slane %v741, 7
    %v781 = vsel %vm257, %v779, %v780
    %v782 = vrot.slane %v742, 7
    %v783 = vsel %vm257, %v780, %v782
    %v784 = vsel %vm257, %v782, %v774
    %v789 = vsel %vm257, %v774, %v779
    %v790 = vmul.f32 %v789, %v235
    %v791 = vmul.f32 %v781, %v236
    %v792 = vmul.f32 %v783, %v237
    %v793 = vmul.f32 %v784, %v238
    %v794 = vmul.f32 %v733, %v790
    %v795 = vmul.f32 %v735, %v791
    %v796 = vmul.f32 %v737, %v792
    %v797 = vmul.f32 %v739, %v793
    %v798 = vadd.f32 %v794, %v740
    %v799 = vadd.f32 %v795, %v741
    %v800 = vadd.f32 %v796, %v742
    %v801 = vadd.f32 %v797, %v743
    %v802 = vmul.f32 %v733, %v769
    %v803 = vmul.f32 %v735, %v770
    %v804 = vmul.f32 %v737, %v771
    %v805 = vmul.f32 %v739, %v772
    %vm806 = vcmp.ge.s32.totalorder %v49, 2
    %vm807 = vcmp.ge.s32.totalorder %v50, 2
    %vm808 = vcmp.ge.s32.totalorder %v51, 2
    %vm809 = vcmp.ge.s32.totalorder %v52, 2
    %v810 = vsel %vm806, 1, 0
    %v811 = vsel %vm807, 1, 0
    %v812 = vsel %vm808, 1, 0
    %v813 = vsel %vm809, 1, 0
    %v814 = vcvt.s32.f32 %v810
    %v815 = vcvt.s32.f32 %v811
    %v816 = vcvt.s32.f32 %v812
    %v817 = vcvt.s32.f32 %v813
    %v819 = vrot.slane %v805, 6
    %vm824 = vcmask 1041408
    %v825 = vrot.slane %v802, 6
    %v826 = vrot.slane %v803, 6
    %v827 = vsel %vm824, %v825, %v826
    %v828 = vrot.slane %v804, 6
    %v829 = vsel %vm824, %v826, %v828
    %v830 = vsel %vm824, %v828, %v819
    %v835 = vsel %vm824, %v819, %v825
    %v836 = vmul.f32 %v835, %v814
    %v837 = vmul.f32 %v827, %v815
    %v838 = vmul.f32 %v829, %v816
    %v839 = vmul.f32 %v830, %v817
    %v840 = vsub.f32 1.0, %v814
    %v841 = vsub.f32 1.0, %v815
    %v842 = vsub.f32 1.0, %v816
    %v843 = vsub.f32 1.0, %v817
    %v844 = vadd.f32 %v836, %v840
    %v845 = vadd.f32 %v837, %v841
    %v846 = vadd.f32 %v838, %v842
    %v847 = vadd.f32 %v839, %v843
    %v849 = vrot.slane %v801, 6
    %v854 = vrot.slane %v798, 6
    %v855 = vrot.slane %v799, 6
    %v856 = vsel %vm824, %v854, %v855
    %v857 = vrot.slane %v800, 6
    %v858 = vsel %vm824, %v855, %v857
    %v859 = vsel %vm824, %v857, %v849
    %v864 = vsel %vm824, %v849, %v854
    %v865 = vmul.f32 %v864, %v814
    %v866 = vmul.f32 %v856, %v815
    %v867 = vmul.f32 %v858, %v816
    %v868 = vmul.f32 %v859, %v817
    %v869 = vmul.f32 %v802, %v865
    %v870 = vmul.f32 %v803, %v866
    %v871 = vmul.f32 %v804, %v867
    %v872 = vmul.f32 %v805, %v868
    %v873 = vadd.f32 %v869, %v798
    %v874 = vadd.f32 %v870, %v799
    %v875 = vadd.f32 %v871, %v800
    %v876 = vadd.f32 %v872, %v801
    %v877 = vmul.f32 %v802, %v844
    %v878 = vmul.f32 %v803, %v845
    %v879 = vmul.f32 %v804, %v846
    %v880 = vmul.f32 %v805, %v847
    %vm881 = vcmp.ge.s32.totalorder %v49, 4
    %vm882 = vcmp.ge.s32.totalorder %v50, 4
    %vm883 = vcmp.ge.s32.totalorder %v51, 4
    %vm884 = vcmp.ge.s32.totalorder %v52, 4
    %v885 = vsel %vm881, 1, 0
    %v886 = vsel %vm882, 1, 0
    %v887 = vsel %vm883, 1, 0
    %v888 = vsel %vm884, 1, 0
    %v889 = vcvt.s32.f32 %v885
    %v890 = vcvt.s32.f32 %v886
    %v891 = vcvt.s32.f32 %v887
    %v892 = vcvt.s32.f32 %v888
    %v894 = vrot.slane %v880, 4
    %vm899 = vcmask 1043456
    %v900 = vrot.slane %v877, 4
    %v901 = vrot.slane %v878, 4
    %v902 = vsel %vm899, %v900, %v901
    %v903 = vrot.slane %v879, 4
    %v904 = vsel %vm899, %v901, %v903
    %v905 = vsel %vm899, %v903, %v894
    %v910 = vsel %vm899, %v894, %v900
    %v911 = vmul.f32 %v910, %v889
    %v912 = vmul.f32 %v902, %v890
    %v913 = vmul.f32 %v904, %v891
    %v914 = vmul.f32 %v905, %v892
    %v915 = vsub.f32 1.0, %v889
    %v916 = vsub.f32 1.0, %v890
    %v917 = vsub.f32 1.0, %v891
    %v918 = vsub.f32 1.0, %v892
    %v919 = vadd.f32 %v911, %v915
    %v920 = vadd.f32 %v912, %v916
    %v921 = vadd.f32 %v913, %v917
    %v922 = vadd.f32 %v914, %v918
    %v924 = vrot.slane %v876, 4
    %v929 = vrot.slane %v873, 4
    %v930 = vrot.slane %v874, 4
    %v931 = vsel %vm899, %v929, %v930
    %v932 = vrot.slane %v875, 4
    %v933 = vsel %vm899, %v930, %v932
    %v934 = vsel %vm899, %v932, %v924
    %v939 = vsel %vm899, %v924, %v929
    %v940 = vmul.f32 %v939, %v889
    %v941 = vmul.f32 %v931, %v890
    %v942 = vmul.f32 %v933, %v891
    %v943 = vmul.f32 %v934, %v892
    %v944 = vmul.f32 %v877, %v940
    %v945 = vmul.f32 %v878, %v941
    %v946 = vmul.f32 %v879, %v942
    %v947 = vmul.f32 %v880, %v943
    %v948 = vadd.f32 %v944, %v873
    %v949 = vadd.f32 %v945, %v874
    %v950 = vadd.f32 %v946, %v875
    %v951 = vadd.f32 %v947, %v876
    %v952 = vmul.f32 %v877, %v919
    %v953 = vmul.f32 %v878, %v920
    %v954 = vmul.f32 %v879, %v921
    %v955 = vmul.f32 %v880, %v922
    %vm956 = vcmp.ge.s32.totalorder %v49, 8
    %vm957 = vcmp.ge.s32.totalorder %v50, 8
    %vm958 = vcmp.ge.s32.totalorder %v51, 8
    %vm959 = vcmp.ge.s32.totalorder %v52, 8
    %v960 = vsel %vm956, 1, 0
    %v961 = vsel %vm957, 1, 0
    %v962 = vsel %vm958, 1, 0
    %v963 = vsel %vm959, 1, 0
    %v964 = vcvt.s32.f32 %v960
    %v965 = vcvt.s32.f32 %v961
    %v966 = vcvt.s32.f32 %v962
    %v967 = vcvt.s32.f32 %v963
    %v968 = vmul.f32 %v951, %v964
    %v969 = vmul.f32 %v948, %v965
    %v970 = vmul.f32 %v949, %v966
    %v971 = vmul.f32 %v950, %v967
    %v972 = vmul.f32 %v952, %v968
    %v973 = vmul.f32 %v953, %v969
    %v974 = vmul.f32 %v954, %v970
    %v975 = vmul.f32 %v955, %v971
    %v976 = vadd.f32 %v972, %v948
    %v977 = vadd.f32 %v973, %v949
    %v978 = vadd.f32 %v974, %v950
    %v979 = vadd.f32 %v975, %v951
    %v980 = vmul.f32 %v976, %v703
    %v981 = vmul.f32 %v977, %v709
    %v982 = vmul.f32 %v978, %v715
    %v983 = vmul.f32 %v979, %v721
    %v984 = vld [vmem:[#allocation5 + $0xd8] sm:$0xff]
    %v985 = vld [vmem:[#allocation5 + $0xe0] sm:$0xff]
    %v986 = vld [vmem:[#allocation5 + $0xe8] sm:$0xff]
    %v987 = vld [vmem:[#allocation5 + $0xf0] sm:$0xff]
    %v988 = vld [vmem:[#allocation5 + $0xf8] sm:$0xff]
    %v989 = vld [vmem:[#allocation5 + $0x100] sm:$0xff]
    %v990 = vld [vmem:[#allocation5 + $0x108] sm:$0xff]
    %v991 = vld [vmem:[#allocation5 + $0x110] sm:$0xff]
    %v992 = vld [vmem:[#allocation5 + $0x118] sm:$0xff]
    %v993 = vld [vmem:[#allocation5 + $0x120] sm:$0xff]
    %v994 = vld [vmem:[#allocation5 + $0x128] sm:$0xff]
    %v995 = vld [vmem:[#allocation5 + $0x130] sm:$0xff]
    %v996 = vld [vmem:[#allocation5 + $0x138] sm:$0xff]
    %v997 = vld [vmem:[#allocation5 + $0x140] sm:$0xff]
    %v998 = vld [vmem:[#allocation5 + $0x148] sm:$0xff]
    %v999 = vld [vmem:[#allocation5 + $0x150] sm:$0xff]
    %v1000 = vld [vmem:[#allocation5 + $0xb8] sm:$0xff]
    %v1001 = vld [vmem:[#allocation5 + $0xc0] sm:$0xff]
    %v1002 = vld [vmem:[#allocation5 + $0xc8] sm:$0xff]
    %v1003 = vld [vmem:[#allocation5 + $0xd0] sm:$0xff]
    %1004 = vmatprep.subr.mxu0 0.0
    %1005 = vmatpush1.msra.mxu0 %v1000
    %1006 = vmatprep.subr.mxu0 0.0
    %1007 = vmatpush1.msra.mxu0 %v1001
    %1008 = vmatprep.subr.mxu0 0.0
    %1009 = vmatpush1.msra.mxu0 %v1002
    %1010 = vmatprep.subr.mxu0 0.0
    %1011 = vmatpush1.msra.mxu0 %v1003
    %1012 = vmatprep.subr.mxu0 0.0
    %1013 = vmatpush1.msra.mxu0 0.0
    %1014 = vmatprep.subr.mxu0 0.0
    %1015 = vmatpush1.msra.mxu0 0.0
    %1016 = vmatprep.subr.mxu0 0.0
    %1017 = vmatpush1.msra.mxu0 0.0
    %1018 = vmatprep.subr.mxu0 0.0
    %1019 = vmatpush1.msra.mxu0 0.0
    %1020 = vmatprep.subr.mxu0 0.0
    %1021 = vmatpush1.msra.mxu0 0.0
    %1022 = vmatprep.subr.mxu0 0.0
    %1023 = vmatpush1.msra.mxu0 0.0
    %1024 = vmatprep.subr.mxu0 0.0
    %1025 = vmatpush1.msra.mxu0 0.0
    %1026 = vmatprep.subr.mxu0 0.0
    %1027 = vmatpush1.msra.mxu0 0.0
    %1028 = vmatprep.subr.mxu0 0.0
    %1029 = vmatpush1.msra.mxu0 0.0
    %1030 = vmatprep.subr.mxu0 0.0
    %1031 = vmatpush1.msra.mxu0 0.0
    %1032 = vmatprep.subr.mxu0 0.0
    %1033 = vmatpush1.msra.mxu0 0.0
    %1034 = vmatprep.subr.mxu0 0.0
    %1035 = vmatpush1.msra.mxu0 0.0
    %1036 = vmatprep.subr.mxu0 0.0
    %1037 = vmatpush1.msra.mxu0 0.0
    %1038 = vmatprep.subr.mxu0 0.0
    %1039 = vmatpush1.msra.mxu0 0.0
    %1040 = vmatprep.subr.mxu0 0.0
    %1041 = vmatpush1.msra.mxu0 0.0
    %1042 = vmatprep.subr.mxu0 0.0
    %1043 = vmatpush1.msra.mxu0 0.0
    %1044 = vmatprep.subr.mxu0 0.0
    %1045 = vmatpush1.msra.mxu0 0.0
    %1046 = vmatprep.subr.mxu0 0.0
    %1047 = vmatpush1.msra.mxu0 0.0
    %1048 = vmatprep.subr.mxu0 0.0
    %1049 = vmatpush1.msra.mxu0 0.0
    %1050 = vmatprep.subr.mxu0 0.0
    %1051 = vmatpush1.msra.mxu0 0.0
    %1052 = vmatprep.subr.mxu0 0.0
    %1053 = vmatpush1.msra.mxu0 0.0
    %1054 = vmatprep.subr.mxu0 0.0
    %1055 = vmatpush1.msra.mxu0 0.0
    %1056 = vmatprep.subr.mxu0 0.0
    %1057 = vmatpush1.msra.mxu0 0.0
    %1058 = vmatprep.subr.mxu0 0.0
    %1059 = vmatpush1.msra.mxu0 0.0
    %1060 = vmatprep.subr.mxu0 0.0
    %1061 = vmatpush1.msra.mxu0 0.0
    %1062 = vmatprep.subr.mxu0 0.0
    %1063 = vmatpush1.msra.mxu0 0.0
    %1064 = vmatprep.subr.mxu0 0.0
    %1065 = vmatpush1.msra.mxu0 0.0
    %1066 = vmatprep.subr.mxu0 0.0
    %1067 = vmatpush1.msra.mxu0 0.0
    %1068 = vmatprep.mubr.f32.mxu0 0.0
    %1069 = vmatmul.mubr.f32.gmra.mrb[0].mxu0 %v361
    %v1070 = vpop.f32.mrb[0].mxu0
    %v1071 = vadd.f32 0.0, %v1070
    %v1072 = vpop.f32.mrb[0].mxu0
    %1073 = vmatprep.mubr.f32.mxu0 0.0
    %1074 = vmatmul.mubr.f32.gmra.mrb[0].mxu0 %v364
    %v1075 = vpop.f32.mrb[0].mxu0
    %v1076 = vadd.f32 0.0, %v1075
    %v1077 = vpop.f32.mrb[0].mxu0
    %1078 = vmatprep.mubr.f32.mxu0 0.0
    %1079 = vmatmul.mubr.f32.gmra.mrb[0].mxu0 %v367
    %v1080 = vpop.f32.mrb[0].mxu0
    %v1081 = vadd.f32 0.0, %v1080
    %v1082 = vpop.f32.mrb[0].mxu0
    %1083 = vmatprep.mubr.f32.mxu0 0.0
    %1084 = vmatmul.mubr.f32.gmra.mrb[0].mxu0 %v370
    %v1085 = vpop.f32.mrb[0].mxu0
    %v1086 = vadd.f32 0.0, %v1085
    %v1087 = vpop.f32.mrb[0].mxu0
    %1088 = vdwg.mxu0
    %1089 = vmatprep.subr.mxu0 0.0
    %1090 = vmatpush1.msra.mxu0 %v984
    %1091 = vmatprep.subr.mxu0 0.0
    %1092 = vmatpush1.msra.mxu0 %v985
    %1093 = vmatprep.subr.mxu0 0.0
    %1094 = vmatpush1.msra.mxu0 %v986
    %1095 = vmatprep.subr.mxu0 0.0
    %1096 = vmatpush1.msra.mxu0 %v987
    %1097 = vmatprep.subr.mxu0 0.0
    %1098 = vmatpush1.msra.mxu0 %v988
    %1099 = vmatprep.subr.mxu0 0.0
    %1100 = vmatpush1.msra.mxu0 %v989
    %1101 = vmatprep.subr.mxu0 0.0
    %1102 = vmatpush1.msra.mxu0 %v990
    %1103 = vmatprep.subr.mxu0 0.0
    %1104 = vmatpush1.msra.mxu0 %v991
    %1105 = vmatprep.subr.mxu0 0.0
    %1106 = vmatpush1.msra.mxu0 %v992
    %1107 = vmatprep.subr.mxu0 0.0
    %1108 = vmatpush1.msra.mxu0 %v993
    %1109 = vmatprep.subr.mxu0 0.0
    %1110 = vmatpush1.msra.mxu0 %v994
    %1111 = vmatprep.subr.mxu0 0.0
    %1112 = vmatpush1.msra.mxu0 %v995
    %1113 = vmatprep.subr.mxu0 0.0
    %1114 = vmatpush1.msra.mxu0 %v996
    %1115 = vmatprep.subr.mxu0 0.0
    %1116 = vmatpush1.msra.mxu0 %v997
    %1117 = vmatprep.subr.mxu0 0.0
    %1118 = vmatpush1.msra.mxu0 %v998
    %1119 = vmatprep.subr.mxu0 0.0
    %1120 = vmatpush1.msra.mxu0 %v999
    %1121 = vmatprep.subr.mxu0 0.0
    %1122 = vmatpush1.msra.mxu0 0.0
    %1123 = vmatprep.subr.mxu0 0.0
    %1124 = vmatpush1.msra.mxu0 0.0
    %1125 = vmatprep.subr.mxu0 0.0
    %1126 = vmatpush1.msra.mxu0 0.0
    %1127 = vmatprep.subr.mxu0 0.0
    %1128 = vmatpush1.msra.mxu0 0.0
    %1129 = vmatprep.subr.mxu0 0.0
    %1130 = vmatpush1.msra.mxu0 0.0
    %1131 = vmatprep.subr.mxu0 0.0
    %1132 = vmatpush1.msra.mxu0 0.0
    %1133 = vmatprep.subr.mxu0 0.0
    %1134 = vmatpush1.msra.mxu0 0.0
    %1135 = vmatprep.subr.mxu0 0.0
    %1136 = vmatpush1.msra.mxu0 0.0
    %1137 = vmatprep.subr.mxu0 0.0
    %1138 = vmatpush1.msra.mxu0 0.0
    %1139 = vmatprep.subr.mxu0 0.0
    %1140 = vmatpush1.msra.mxu0 0.0
    %1141 = vmatprep.subr.mxu0 0.0
    %1142 = vmatpush1.msra.mxu0 0.0
    %1143 = vmatprep.subr.mxu0 0.0
    %1144 = vmatpush1.msra.mxu0 0.0
    %1145 = vmatprep.subr.mxu0 0.0
    %1146 = vmatpush1.msra.mxu0 0.0
    %1147 = vmatprep.subr.mxu0 0.0
    %1148 = vmatpush1.msra.mxu0 0.0
    %1149 = vmatprep.subr.mxu0 0.0
    %1150 = vmatpush1.msra.mxu0 0.0
    %1151 = vmatprep.subr.mxu0 0.0
    %1152 = vmatpush1.msra.mxu0 0.0
    %1153 = vmatprep.mubr.f32.mxu0 0.0
    %1154 = vmatmul.mubr.f32.gmra.mrb[0].mxu0 %v980
    %v1155 = vpop.f32.mrb[0].mxu0
    %v1156 = vadd.f32 %v1071, %v1155
    %v1157 = vpop.f32.mrb[0].mxu0
    %1158 = vmatprep.mubr.f32.mxu0 0.0
    %1159 = vmatmul.mubr.f32.gmra.mrb[0].mxu0 %v981
    %v1160 = vpop.f32.mrb[0].mxu0
    %v1161 = vadd.f32 %v1076, %v1160
    %v1162 = vpop.f32.mrb[0].mxu0
    %1163 = vmatprep.mubr.f32.mxu0 0.0
    %1164 = vmatmul.mubr.f32.gmra.mrb[0].mxu0 %v982
    %v1165 = vpop.f32.mrb[0].mxu0
    %v1166 = vadd.f32 %v1081, %v1165
    %v1167 = vpop.f32.mrb[0].mxu0
    %1168 = vmatprep.mubr.f32.mxu0 0.0
    %1169 = vmatmul.mubr.f32.gmra.mrb[0].mxu0 %v983
    %v1170 = vpop.f32.mrb[0].mxu0
    %v1171 = vadd.f32 %v1086, %v1170
    %v1172 = vpop.f32.mrb[0].mxu0
    %1173 = vdwg.mxu0
    %v1174 = vadd.f32 %v40, %v1156
    %v1175 = vadd.f32 %v41, %v1161
    %v1176 = vadd.f32 %v42, %v1166
    %v1177 = vadd.f32 %v43, %v1171
    %v1178 = vld [vmem:[#allocation5 + $0x15a] sm:$0x1]
    %v1179 = vld [vmem:[#allocation5 + $0x15b] sm:$0x1]
    %v1180 = vsel %vm55, %v1174, 0.0
    %1181 = vadd.xlane.f32.xlu0 %v1180
    %v1182 = vpop.xlane.xlu0 %1181
    %v1183 = vsel %vm55, %v1175, 0.0
    %1184 = vadd.xlane.f32.xlu0 %v1183
    %v1185 = vpop.xlane.xlu0 %1184
    %v1186 = vsel %vm55, %v1176, 0.0
    %1187 = vadd.xlane.f32.xlu0 %v1186
    %v1188 = vpop.xlane.xlu0 %1187
    %v1189 = vsel %vm55, %v1177, 0.0
    %1190 = vadd.xlane.f32.xlu0 %v1189
    %v1191 = vpop.xlane.xlu0 %1190
    %v1192 = vmul.f32 %v1182, %v68
    %v1193 = vmul.f32 %v1185, %v68
    %v1194 = vmul.f32 %v1188, %v68
    %v1195 = vmul.f32 %v1191, %v68
    %v1196 = vsub.f32 %v1174, %v1192
    %v1197 = vsub.f32 %v1175, %v1193
    %v1198 = vsub.f32 %v1176, %v1194
    %v1199 = vsub.f32 %v1177, %v1195
    %v1200 = vmul.f32 %v1196, %v1196
    %v1201 = vmul.f32 %v1197, %v1197
    %v1202 = vmul.f32 %v1198, %v1198
    %v1203 = vmul.f32 %v1199, %v1199
    %v1204 = vsel %vm55, %v1200, 0.0
    %1205 = vadd.xlane.f32.xlu0 %v1204
    %v1206 = vpop.xlane.xlu0 %1205
    %v1207 = vsel %vm55, %v1201, 0.0
    %1208 = vadd.xlane.f32.xlu0 %v1207
    %v1209 = vpop.xlane.xlu0 %1208
    %v1210 = vsel %vm55, %v1202, 0.0
    %1211 = vadd.xlane.f32.xlu0 %v1210
    %v1212 = vpop.xlane.xlu0 %1211
    %v1213 = vsel %vm55, %v1203, 0.0
    %1214 = vadd.xlane.f32.xlu0 %v1213
    %v1215 = vpop.xlane.xlu0 %1214
    %v1216 = vmul.f32 %v1206, %v68
    %v1217 = vmul.f32 %v1209, %v68
    %v1218 = vmul.f32 %v1212, %v68
    %v1219 = vmul.f32 %v1215, %v68
    %v1220 = vadd.f32 %v1216, 1e-05
    %v1221 = vadd.f32 %v1217, 1e-05
    %v1222 = vadd.f32 %v1218, 1e-05
    %v1223 = vadd.f32 %v1219, 1e-05
    %v1224 = vrsqrt.pop %v1220
    %v1225 = vrsqrt.pop %v1221
    %v1226 = vrsqrt.pop %v1222
    %v1227 = vrsqrt.pop %v1223
    %v1228 = vmul.f32 %v1196, %v1224
    %v1229 = vmul.f32 %v1197, %v1225
    %v1230 = vmul.f32 %v1198, %v1226
    %v1231 = vmul.f32 %v1199, %v1227
    %v1232 = vlaneseq
    %v1233 = vshrl.u32 %v1232, 7
    %v1234 = vsub.s32 0, %v1233
    %v1235 = vrot.slane %v1178, %v1234
    %v1236 = vmul.f32 %v1228, %v1235
    %v1237 = vmul.f32 %v1229, %v1235
    %v1238 = vmul.f32 %v1230, %v1235
    %v1239 = vmul.f32 %v1231, %v1235
    %v1240 = vlaneseq
    %v1241 = vshrl.u32 %v1240, 7
    %v1242 = vsub.s32 0, %v1241
    %v1243 = vrot.slane %v1179, %v1242
    %v1244 = vadd.f32 %v1236, %v1243
    %v1245 = vadd.f32 %v1237, %v1243
    %v1246 = vadd.f32 %v1238, %v1243
    %v1247 = vadd.f32 %v1239, %v1243
    %v1248 = vld [vmem:[#allocation5 + $0x160] sm:$0xff]
    %v1249 = vld [vmem:[#allocation5 + $0x168] sm:$0xff]
    %v1250 = vld [vmem:[#allocation5 + $0x170] sm:$0xff]
    %v1251 = vld [vmem:[#allocation5 + $0x178] sm:$0xff]
    %v1252 = vld [vmem:[#allocation5 + $0x180] sm:$0x1]
    %v1253 = vlaneseq
    %v1254 = vshrl.u32 %v1253, 7
    %v1255 = vsub.s32 0, %v1254
    %v1256 = vrot.slane %v1252, %v1255
    %v1258 = vsel %vm55, %v1244, 0
    %v1261 = vsel %vm55, %v1245, 0
    %v1264 = vsel %vm55, %v1246, 0
    %v1267 = vsel %vm55, %v1247, 0
    %1269 = vmatprep.subr.mxu0 0.0
    %1270 = vmatpush1.msra.mxu0 %v1248
    %1271 = vmatprep.subr.mxu0 0.0
    %1272 = vmatpush1.msra.mxu0 %v1249
    %1273 = vmatprep.subr.mxu0 0.0
    %1274 = vmatpush1.msra.mxu0 %v1250
    %1275 = vmatprep.subr.mxu0 0.0
    %1276 = vmatpush1.msra.mxu0 %v1251
    %1277 = vmatprep.subr.mxu0 0.0
    %1278 = vmatpush1.msra.mxu0 0.0
    %1279 = vmatprep.subr.mxu0 0.0
    %1280 = vmatpush1.msra.mxu0 0.0
    %1281 = vmatprep.subr.mxu0 0.0
    %1282 = vmatpush1.msra.mxu0 0.0
    %1283 = vmatprep.subr.mxu0 0.0
    %1284 = vmatpush1.msra.mxu0 0.0
    %1285 = vmatprep.subr.mxu0 0.0
    %1286 = vmatpush1.msra.mxu0 0.0
    %1287 = vmatprep.subr.mxu0 0.0
    %1288 = vmatpush1.msra.mxu0 0.0
    %1289 = vmatprep.subr.mxu0 0.0
    %1290 = vmatpush1.msra.mxu0 0.0
    %1291 = vmatprep.subr.mxu0 0.0
    %1292 = vmatpush1.msra.mxu0 0.0
    %1293 = vmatprep.subr.mxu0 0.0
    %1294 = vmatpush1.msra.mxu0 0.0
    %1295 = vmatprep.subr.mxu0 0.0
    %1296 = vmatpush1.msra.mxu0 0.0
    %1297 = vmatprep.subr.mxu0 0.0
    %1298 = vmatpush1.msra.mxu0 0.0
    %1299 = vmatprep.subr.mxu0 0.0
    %1300 = vmatpush1.msra.mxu0 0.0
    %1301 = vmatprep.subr.mxu0 0.0
    %1302 = vmatpush1.msra.mxu0 0.0
    %1303 = vmatprep.subr.mxu0 0.0
    %1304 = vmatpush1.msra.mxu0 0.0
    %1305 = vmatprep.subr.mxu0 0.0
    %1306 = vmatpush1.msra.mxu0 0.0
    %1307 = vmatprep.subr.mxu0 0.0
    %1308 = vmatpush1.msra.mxu0 0.0
    %1309 = vmatprep.subr.mxu0 0.0
    %1310 = vmatpush1.msra.mxu0 0.0
    %1311 = vmatprep.subr.mxu0 0.0
    %1312 = vmatpush1.msra.mxu0 0.0
    %1313 = vmatprep.subr.mxu0 0.0
    %1314 = vmatpush1.msra.mxu0 0.0
    %1315 = vmatprep.subr.mxu0 0.0
    %1316 = vmatpush1.msra.mxu0 0.0
    %1317 = vmatprep.subr.mxu0 0.0
    %1318 = vmatpush1.msra.mxu0 0.0
    %1319 = vmatprep.subr.mxu0 0.0
    %1320 = vmatpush1.msra.mxu0 0.0
    %1321 = vmatprep.subr.mxu0 0.0
    %1322 = vmatpush1.msra.mxu0 0.0
    %1323 = vmatprep.subr.mxu0 0.0
    %1324 = vmatpush1.msra.mxu0 0.0
    %1325 = vmatprep.subr.mxu0 0.0
    %1326 = vmatpush1.msra.mxu0 0.0
    %1327 = vmatprep.subr.mxu0 0.0
    %1328 = vmatpush1.msra.mxu0 0.0
    %1329 = vmatprep.subr.mxu0 0.0
    %1330 = vmatpush1.msra.mxu0 0.0
    %1331 = vmatprep.subr.mxu0 0.0
    %1332 = vmatpush1.msra.mxu0 0.0
    %1333 = vmatprep.mubr.f32.mxu0 0.0
    %1334 = vmatmul.mubr.f32.gmra.mrb[0].mxu0 %v1258
    %v1335 = vpop.f32.mrb[0].mxu0
    %v1336 = vadd.f32 %v1256, %v1335
    %v1337 = vpop.f32.mrb[0].mxu0
    %1338 = vmatprep.mubr.f32.mxu0 0.0
    %1339 = vmatmul.mubr.f32.gmra.mrb[0].mxu0 %v1261
    %v1340 = vpop.f32.mrb[0].mxu0
    %v1341 = vadd.f32 %v1256, %v1340
    %v1342 = vpop.f32.mrb[0].mxu0
    %1343 = vmatprep.mubr.f32.mxu0 0.0
    %1344 = vmatmul.mubr.f32.gmra.mrb[0].mxu0 %v1264
    %v1345 = vpop.f32.mrb[0].mxu0
    %v1346 = vadd.f32 %v1256, %v1345
    %v1347 = vpop.f32.mrb[0].mxu0
    %1348 = vmatprep.mubr.f32.mxu0 0.0
    %1349 = vmatmul.mubr.f32.gmra.mrb[0].mxu0 %v1267
    %v1350 = vpop.f32.mrb[0].mxu0
    %v1351 = vadd.f32 %v1256, %v1350
    %v1352 = vpop.f32.mrb[0].mxu0
    %1353 = vdwg.mxu0
    %v1354 = vmul.f32 %v1336, 0.5
    %v1355 = vmul.f32 %v1341, 0.5
    %v1356 = vmul.f32 %v1346, 0.5
    %v1357 = vmul.f32 %v1351, 0.5
    %v1358 = vmul.f32 %v1336, 0.044715
    %v1359 = vmul.f32 %v1341, 0.044715
    %v1360 = vmul.f32 %v1346, 0.044715
    %v1361 = vmul.f32 %v1351, 0.044715
    %v1362 = vmul.f32 %v1358, %v1336
    %v1363 = vmul.f32 %v1359, %v1341
    %v1364 = vmul.f32 %v1360, %v1346
    %v1365 = vmul.f32 %v1361, %v1351
    %v1366 = vmul.f32 %v1362, %v1336
    %v1367 = vmul.f32 %v1363, %v1341
    %v1368 = vmul.f32 %v1364, %v1346
    %v1369 = vmul.f32 %v1365, %v1351
    %v1370 = vadd.f32 %v1336, %v1366
    %v1371 = vadd.f32 %v1341, %v1367
    %v1372 = vadd.f32 %v1346, %v1368
    %v1373 = vadd.f32 %v1351, %v1369
    %v1374 = vmul.f32 %v1370, 0.7978846
    %v1375 = vmul.f32 %v1371, 0.7978846
    %v1376 = vmul.f32 %v1372, 0.7978846
    %v1377 = vmul.f32 %v1373, 0.7978846
    %v1378 = vtanh.pop %v1374
    %v1379 = vtanh.pop %v1375
    %v1380 = vtanh.pop %v1376
    %v1381 = vtanh.pop %v1377
    %v1382 = vadd.f32 %v1378, 1.0
    %v1383 = vadd.f32 %v1379, 1.0
    %v1384 = vadd.f32 %v1380, 1.0
    %v1385 = vadd.f32 %v1381, 1.0
    %v1386 = vmul.f32 %v1354, %v1382
    %v1387 = vmul.f32 %v1355, %v1383
    %v1388 = vmul.f32 %v1356, %v1384
    %v1389 = vmul.f32 %v1357, %v1385
    %v1390 = vld [vmem:[#allocation5 + $0x188] sm:$0xff]
    %v1391 = vld [vmem:[#allocation5 + $0x190] sm:$0xff]
    %v1392 = vld [vmem:[#allocation5 + $0x198] sm:$0xff]
    %v1393 = vld [vmem:[#allocation5 + $0x1a0] sm:$0xff]
    %v1394 = vld [vmem:[#allocation5 + $0x1a8] sm:$0xff]
    %v1395 = vld [vmem:[#allocation5 + $0x1b0] sm:$0xff]
    %v1396 = vld [vmem:[#allocation5 + $0x1b8] sm:$0xff]
    %v1397 = vld [vmem:[#allocation5 + $0x1c0] sm:$0xff]
    %v1398 = vld [vmem:[#allocation5 + $0x1c8] sm:$0xff]
    %v1399 = vld [vmem:[#allocation5 + $0x1d0] sm:$0xff]
    %v1400 = vld [vmem:[#allocation5 + $0x1d8] sm:$0xff]
    %v1401 = vld [vmem:[#allocation5 + $0x1e0] sm:$0xff]
    %v1402 = vld [vmem:[#allocation5 + $0x1e8] sm:$0xff]
    %v1403 = vld [vmem:[#allocation5 + $0x1f0] sm:$0xff]
    %v1404 = vld [vmem:[#allocation5 + $0x1f8] sm:$0xff]
    %v1405 = vld [vmem:[#allocation5 + $0x200] sm:$0xff]
    %v1406 = vld [vmem:[#allocation5 + $0x208] sm:$0x1]
    %1407 = vmatprep.subr.mxu0 0.0
    %1408 = vmatpush1.msra.mxu0 %v1390
    %1409 = vmatprep.subr.mxu0 0.0
    %1410 = vmatpush1.msra.mxu0 %v1391
    %1411 = vmatprep.subr.mxu0 0.0
    %1412 = vmatpush1.msra.mxu0 %v1392
    %1413 = vmatprep.subr.mxu0 0.0
    %1414 = vmatpush1.msra.mxu0 %v1393
    %1415 = vmatprep.subr.mxu0 0.0
    %1416 = vmatpush1.msra.mxu0 %v1394
    %1417 = vmatprep.subr.mxu0 0.0
    %1418 = vmatpush1.msra.mxu0 %v1395
    %1419 = vmatprep.subr.mxu0 0.0
    %1420 = vmatpush1.msra.mxu0 %v1396
    %1421 = vmatprep.subr.mxu0 0.0
    %1422 = vmatpush1.msra.mxu0 %v1397
    %1423 = vmatprep.subr.mxu0 0.0
    %1424 = vmatpush1.msra.mxu0 %v1398
    %1425 = vmatprep.subr.mxu0 0.0
    %1426 = vmatpush1.msra.mxu0 %v1399
    %1427 = vmatprep.subr.mxu0 0.0
    %1428 = vmatpush1.msra.mxu0 %v1400
    %1429 = vmatprep.subr.mxu0 0.0
    %1430 = vmatpush1.msra.mxu0 %v1401
    %1431 = vmatprep.subr.mxu0 0.0
    %1432 = vmatpush1.msra.mxu0 %v1402
    %1433 = vmatprep.subr.mxu0 0.0
    %1434 = vmatpush1.msra.mxu0 %v1403
    %1435 = vmatprep.subr.mxu0 0.0
    %1436 = vmatpush1.msra.mxu0 %v1404
    %1437 = vmatprep.subr.mxu0 0.0
    %1438 = vmatpush1.msra.mxu0 %v1405
    %1439 = vmatprep.subr.mxu0 0.0
    %1440 = vmatpush1.msra.mxu0 0.0
    %1441 = vmatprep.subr.mxu0 0.0
    %1442 = vmatpush1.msra.mxu0 0.0
    %1443 = vmatprep.subr.mxu0 0.0
    %1444 = vmatpush1.msra.mxu0 0.0
    %1445 = vmatprep.subr.mxu0 0.0
    %1446 = vmatpush1.msra.mxu0 0.0
    %1447 = vmatprep.subr.mxu0 0.0
    %1448 = vmatpush1.msra.mxu0 0.0
    %1449 = vmatprep.subr.mxu0 0.0
    %1450 = vmatpush1.msra.mxu0 0.0
    %1451 = vmatprep.subr.mxu0 0.0
    %1452 = vmatpush1.msra.mxu0 0.0
    %1453 = vmatprep.subr.mxu0 0.0
    %1454 = vmatpush1.msra.mxu0 0.0
    %1455 = vmatprep.subr.mxu0 0.0
    %1456 = vmatpush1.msra.mxu0 0.0
    %1457 = vmatprep.subr.mxu0 0.0
    %1458 = vmatpush1.msra.mxu0 0.0
    %1459 = vmatprep.subr.mxu0 0.0
    %1460 = vmatpush1.msra.mxu0 0.0
    %1461 = vmatprep.subr.mxu0 0.0
    %1462 = vmatpush1.msra.mxu0 0.0
    %1463 = vmatprep.subr.mxu0 0.0
    %1464 = vmatpush1.msra.mxu0 0.0
    %1465 = vmatprep.subr.mxu0 0.0
    %1466 = vmatpush1.msra.mxu0 0.0
    %1467 = vmatprep.subr.mxu0 0.0
    %1468 = vmatpush1.msra.mxu0 0.0
    %1469 = vmatprep.subr.mxu0 0.0
    %1470 = vmatpush1.msra.mxu0 0.0
    %1471 = vmatprep.mubr.f32.mxu0 0.0
    %1472 = vmatmul.mubr.f32.gmra.mrb[0].mxu0 %v1386
    %v1473 = vpop.f32.mrb[0].mxu0
    %v1474 = vadd.f32 0.0, %v1473
    %v1475 = vpop.f32.mrb[0].mxu0
    %1476 = vmatprep.mubr.f32.mxu0 0.0
    %1477 = vmatmul.mubr.f32.gmra.mrb[0].mxu0 %v1387
    %v1478 = vpop.f32.mrb[0].mxu0
    %v1479 = vadd.f32 0.0, %v1478
    %v1480 = vpop.f32.mrb[0].mxu0
    %1481 = vmatprep.mubr.f32.mxu0 0.0
    %1482 = vmatmul.mubr.f32.gmra.mrb[0].mxu0 %v1388
    %v1483 = vpop.f32.mrb[0].mxu0
    %v1484 = vadd.f32 0.0, %v1483
    %v1485 = vpop.f32.mrb[0].mxu0
    %1486 = vmatprep.mubr.f32.mxu0 0.0
    %1487 = vmatmul.mubr.f32.gmra.mrb[0].mxu0 %v1389
    %v1488 = vpop.f32.mrb[0].mxu0
    %v1489 = vadd.f32 0.0, %v1488
    %v1490 = vpop.f32.mrb[0].mxu0
    %1491 = vdwg.mxu0
    %v1492 = vadd.f32 %v1174, %v1474
    %v1493 = vadd.f32 %v1175, %v1479
    %v1494 = vadd.f32 %v1176, %v1484
    %v1495 = vadd.f32 %v1177, %v1489
    %v1496 = vlaneseq
    %v1497 = vshrl.u32 %v1496, 7
    %v1498 = vsub.s32 0, %v1497
    %v1499 = vrot.slane %v1406, %v1498
    %v1500 = vadd.f32 %v1492, %v1499
    %v1501 = vadd.f32 %v1493, %v1499
    %v1502 = vadd.f32 %v1494, %v1499
    %v1503 = vadd.f32 %v1495, %v1499
    %1504 = vst.msk [vmem:[#allocation7] sm:$0xff] %vm55, %v1500
    %1505 = vst.msk [vmem:[#allocation7 + $0x8] sm:$0xff] %vm55, %v1501
    %1506 = vst.msk [vmem:[#allocation7 + $0x10] sm:$0xff] %vm55, %v1502
    %1507 = vst.msk [vmem:[#allocation7 + $0x18] sm:$0xff] %vm55, %v1503
    // Predicated region
    $region18: #{block_forward.1} parent=1 // pred_check
      _
    $region19: #{block_forward.1} parent=1 // pred_check_branch
      %1509 = sbr.rel (0) target = $region21
    $region20: #{block_forward.1} parent=1 // pred_region
      %s1511 = ssub.s32 512, 512
      %1512 = vsyncadd [#allocation4], %s1511
      %s1513 = sshll.u32 [#allocation7], 4
      %s1514 = int_to_ptr.vmem [resolvable:$true] %s1513
      %1519 = dma.vmem_to_hbm [thread:$0]  %s1514, 512, %s2, [#allocation4], 128, 128, 8
    $region21: #{block_forward.1} parent=1 // pred_fallthru
      _
    // Predicated region
    $region22: #{block_forward.1} parent=1 // pred_check
      _
    $region23: #{block_forward.1} parent=1 // pred_check_branch
      %1521 = sbr.rel (0) target = $region25
    $region24: #{block_forward.1} parent=1 // pred_region
      %1522 = dma.done [#allocation4], 512
    $region25: #{block_forward.1} parent=1 // pred_fallthru
      _
    %1523 = vsyncpa [#allocation3], 1
    %1524 = vsyncpa [#allocation6], 1
    %1525 = vsyncpa [#allocation4], 1

</llo_original>
